<compile_context>
chip_gen: v6e
topology: v6e:2x2x1
jax: 0.10.0
libtpu: 0.0.40
codegen_flags: <defaults>
</compile_context>

<pallas_src>
import jax
import jax.numpy as jnp
from jax.experimental import pallas as pl
from jax.experimental.pallas import tpu as pltpu

SH_DIM = 16           # spherical harmonics, degree 4
FEA_DIM = 16
NRM_DIM = 3
IN_DIM = SH_DIM + FEA_DIM + NRM_DIM   # 35 true decoder input dims
HIDDEN = 64
OUT_DIM = 3

# packed, lane-dense layouts used by the kernel
IN_ROWS = 3 + FEA_DIM + NRM_DIM       # 22 rows: 0:3 d | 3:19 fea | 19:22 normal
ROW_D = 0
ROW_FEA = 3
ROW_NRM = ROW_FEA + FEA_DIM           # 19
W3_PAD_ROWS = 8                       # W3^T padded to 8 output rows for the MXU


def _sh_deg4(x, y, z, axis):
    """tcnn SphericalHarmonics, degree 4 (16 components).

    x, y, z carry a singleton dim along `axis`; the 16 components are
    concatenated along that axis (axis=0 -> feature-major rows in-kernel,
    axis=-1 -> feature-last columns for the reference).
    """
    xy, yz, xz = x * y, y * z, x * z
    x2, y2, z2 = x * x, y * y, z * z
    comps = [
        jnp.full_like(x, 0.28209479177387814),
        -0.48860251190291987 * y,
        0.48860251190291987 * z,
        -0.48860251190291987 * x,
        1.0925484305920792 * xy,
        -1.0925484305920792 * yz,
        0.94617469575755997 * z2 - 0.31539156525251999,
        -1.0925484305920792 * xz,
        0.54627421529603959 * x2 - 0.54627421529603959 * y2,
        0.59004358992664352 * y * (-3.0 * x2 + y2),
        2.8906114426405538 * xy * z,
        0.45704579946446572 * y * (1.0 - 5.0 * z2),
        0.3731763325901154 * z * (5.0 * z2 - 3.0),
        0.45704579946446572 * x * (1.0 - 5.0 * z2),
        1.4453057213202769 * z * (x2 - y2),
        0.59004358992664352 * x * (-x2 + 3.0 * y2),
    ]
    return jnp.concatenate(comps, axis=axis)


def rendering_kernel(x_ref, w1in_ref, w1sh_ref, w2_ref, w3_ref, o_ref):
    """One tile of points, feature-major.

    x_ref    : [22, T] f32   packed inputs (d / fea / normal)
    w1in_ref : [64, 22] bf16 W1^T restricted to fea/normal rows (zeros under d)
    w1sh_ref : [64, 16] bf16 W1^T restricted to SH rows
    w2_ref   : [64, 64] bf16 W2^T
    w3_ref   : [ 8, 64] bf16 W3^T padded with 5 zero rows
    o_ref    : [ 3, T] f32   rgb
    """
    x = x_ref[ROW_D + 0:ROW_D + 1, :]     # [1, T] lane-dense rows
    y = x_ref[ROW_D + 1:ROW_D + 2, :]
    z = x_ref[ROW_D + 2:ROW_D + 3, :]
    # (d+1)/2 in the torch forward + tcnn SH's [0,1]->[-1,1] remap cancel out,
    # so SH is evaluated directly on d (same semantics, no dead VPU work).
    sh = _sh_deg4(x, y, z, axis=0)                                     # [16, T] f32

    # layer 1: W1^T @ [sh; fea; normal]  (two MXU dots, bf16 operands, f32 acc)
    h = jnp.dot(w1in_ref[...], x_ref[...].astype(jnp.bfloat16),
                preferred_element_type=jnp.float32)
    h = h + jnp.dot(w1sh_ref[...], sh.astype(jnp.bfloat16),
                    preferred_element_type=jnp.float32)
    h = jnp.maximum(h, 0.0)                                            # [64, T]

    # layer 2
    h = jnp.dot(w2_ref[...], h.astype(jnp.bfloat16),
                preferred_element_type=jnp.float32)
    h = jnp.maximum(h, 0.0)                                            # [64, T]

    # output layer + sigmoid, lane-dense [3, T] store (only real rgb rows)
    rgb = jnp.dot(w3_ref[...], h.astype(jnp.bfloat16),
                  preferred_element_type=jnp.float32)                  # [8, T]
    o_ref[...] = jax.nn.sigmoid(rgb[0:OUT_DIM, :])


def rendering_net(d, fea, normal, w1, w2, w3, *, tile=1024):
    """RenderingNet forward (use_normal=True).

    d:[N,3], fea:[N,16], normal:[N,3]; w1:[35,64], w2:[64,64], w3:[64,3].
    Returns rgb:[N,3] float32.
    """
    # TODO(synk): use_normal=False config branch (decoder input = 32 dims) not wired up.
    assert tile % 128 == 0
    n = d.shape[0]
    n_pad = ((n + tile - 1) // tile) * tile     # ragged-tail handling
    grid = (n_pad // tile,)

    # Pack inputs feature-major into one lane-dense [22, n_pad] f32 slab.
    x = jnp.concatenate([d, fea, normal], axis=-1).astype(jnp.float32)      # [n, 22]
    x = jnp.pad(x, ((0, n_pad - n), (0, 0))).T                              # [22, n_pad]

    # Split / transpose / pad weights host-side; cast to bf16 for the MXU.
    w1 = w1.astype(jnp.float32)
    w1t_sh = w1[:SH_DIM, :].T                                               # [64, 16]
    w1t_in = jnp.zeros((HIDDEN, IN_ROWS), jnp.float32)
    w1t_in = w1t_in.at[:, ROW_FEA:ROW_FEA + FEA_DIM].set(w1[SH_DIM:SH_DIM + FEA_DIM, :].T)
    w1t_in = w1t_in.at[:, ROW_NRM:ROW_NRM + NRM_DIM].set(w1[SH_DIM + FEA_DIM:, :].T)
    w2t = w2.astype(jnp.float32).T                                          # [64, 64]
    w3t = jnp.zeros((W3_PAD_ROWS, HIDDEN), jnp.float32).at[:OUT_DIM, :].set(
        w3.astype(jnp.float32).T)                                           # [8, 64]
    w1t_in, w1t_sh, w2t, w3t = (a.astype(jnp.bfloat16)
                                for a in (w1t_in, w1t_sh, w2t, w3t))

    flops_per_pt = (2 * HIDDEN * (IN_ROWS + SH_DIM)
                    + 2 * HIDDEN * HIDDEN
                    + 2 * W3_PAD_ROWS * HIDDEN)
    weight_bytes = 2 * (HIDDEN * IN_ROWS + HIDDEN * SH_DIM
                        + HIDDEN * HIDDEN + W3_PAD_ROWS * HIDDEN)
    cost = pl.CostEstimate(
        flops=n_pad * flops_per_pt,
        transcendentals=n_pad * OUT_DIM,
        bytes_accessed=(IN_ROWS + OUT_DIM) * n_pad * 4 + weight_bytes,
    )

    out_t = pl.pallas_call(
        rendering_kernel,
        out_shape=jax.ShapeDtypeStruct((OUT_DIM, n_pad), jnp.float32),
        grid_spec=pltpu.PrefetchScalarGridSpec(
            num_scalar_prefetch=0,
            grid=grid,
            in_specs=[
                pl.BlockSpec((IN_ROWS, tile), lambda i: (0, i)),     # packed inputs
                pl.BlockSpec((HIDDEN, IN_ROWS), lambda i: (0, 0)),   # W1^T (fea/nrm)
                pl.BlockSpec((HIDDEN, SH_DIM), lambda i: (0, 0)),    # W1^T (SH)
                pl.BlockSpec((HIDDEN, HIDDEN), lambda i: (0, 0)),    # W2^T
                pl.BlockSpec((W3_PAD_ROWS, HIDDEN), lambda i: (0, 0)),  # W3^T (padded)
            ],
            out_specs=pl.BlockSpec((OUT_DIM, tile), lambda i: (0, i)),
        ),
        compiler_params=pltpu.CompilerParams(
            dimension_semantics=("parallel",),
            # ~2*(22+3)*tile*4 B of double-buffered blocks + <1 MiB activations
            # per step at tile=1024..4096; 32 MiB leaves ample headroom on every
            # gen (well inside v7x's 64 MiB physical VMEM).
            vmem_limit_bytes=32 * 1024 * 1024,
        ),
        cost_estimate=cost,
    )(x, w1t_in, w1t_sh, w2t, w3t)

    return out_t[:, :n].T                                                   # [N, 3]


def _reference(d, fea, normal, w1, w2, w3):
    """Pure-JAX reference with matching bf16-operand / f32-accumulate matmuls."""
    x, y, z = d[:, 0:1], d[:, 1:2], d[:, 2:3]       # (d+1)/2 then *2-1 == identity
    sh = _sh_deg4(x, y, z, axis=-1)                                         # [N, 16]
    h = jnp.concatenate([sh, fea, normal], axis=-1)                         # [N, 35]

    def mm(a, b):
        return jnp.dot(a.astype(jnp.bfloat16), b.astype(jnp.bfloat16),
                       preferred_element_type=jnp.float32)

    h = jnp.maximum(mm(h, w1), 0.0)
    h = jnp.maximum(mm(h, w2), 0.0)
    return jax.nn.sigmoid(mm(h, w3))


if __name__ == "__main__":
    key = jax.random.PRNGKey(0)
    kd, kf, kn, k1, k2, k3 = jax.random.split(key, 6)

    N = 1000  # not a tile multiple on purpose: exercises the ragged-tail padding
    d = jax.random.uniform(kd, (N, 3), jnp.float32, minval=-1.0, maxval=1.0)
    fea = jax.random.normal(kf, (N, FEA_DIM), jnp.float32)
    normal = jax.random.normal(kn, (N, NRM_DIM), jnp.float32)

    # tcnn FullyFusedMLP has no biases; w1 covers the true 35 input dims.
    w1 = jax.random.normal(k1, (IN_DIM, HIDDEN), jnp.float32) / jnp.sqrt(IN_DIM)
    w2 = jax.random.normal(k2, (HIDDEN, HIDDEN), jnp.float32) / jnp.sqrt(HIDDEN)
    w3 = jax.random.normal(k3, (HIDDEN, OUT_DIM), jnp.float32) / jnp.sqrt(HIDDEN)

    out = rendering_net(d, fea, normal, w1, w2, w3, tile=512)  # grid=2 at N=1000
    out = jax.block_until_ready(out)

    ref = _reference(d, fea, normal, w1, w2, w3)
    assert out.shape == (N, OUT_DIM)
    err = jnp.max(jnp.abs(out - ref))
    assert jnp.allclose(out, ref, atol=2e-3, rtol=2e-3), f"mismatch vs reference, max|diff|={err}"
    print("KERNEL_OK")
</pallas_src>

<mosaic_0001>
module attributes {stable_mosaic.version = 11 : i64} {
  func.func @rendering_kernel(%arg0: i32, %arg1: memref<22x512xf32, #tpu.memory_space<vmem>>, %arg2: memref<64x22xbf16, #tpu.memory_space<vmem>>, %arg3: memref<64x16xbf16, #tpu.memory_space<vmem>>, %arg4: memref<64x64xbf16, #tpu.memory_space<vmem>>, %arg5: memref<8x64xbf16, #tpu.memory_space<vmem>>, %arg6: memref<3x512xf32, #tpu.memory_space<vmem>>) attributes {dimension_semantics = [#tpu.dimension_semantics<parallel>], iteration_bounds = array<i64: 2>, scalar_prefetch = 0 : i64, scratch_operands = 0 : i64, tpu.core_type = #tpu.core_type<tc>, window_params = [{transform_indices = @transform_0, window_bounds = array<i64: 22, 512>}, {pipeline_mode = #tpu.pipeline_mode<synchronous>, transform_indices = @transform_1, window_bounds = array<i64: 64, 22>}, {pipeline_mode = #tpu.pipeline_mode<synchronous>, transform_indices = @transform_2, window_bounds = array<i64: 64, 16>}, {pipeline_mode = #tpu.pipeline_mode<synchronous>, transform_indices = @transform_3, window_bounds = array<i64: 64, 64>}, {pipeline_mode = #tpu.pipeline_mode<synchronous>, transform_indices = @transform_4, window_bounds = array<i64: 8, 64>}, {transform_indices = @transform_5, window_bounds = array<i64: 3, 512>}]} {
    %c0 = arith.constant 0 : index
    %c0_0 = arith.constant 0 : index
    %0 = vector.load %arg1[%c0, %c0_0] : memref<22x512xf32, #tpu.memory_space<vmem>>, vector<1x512xf32>
    %c1 = arith.constant 1 : index
    %c0_1 = arith.constant 0 : index
    %1 = vector.load %arg1[%c1, %c0_1] : memref<22x512xf32, #tpu.memory_space<vmem>>, vector<1x512xf32>
    %c2 = arith.constant 2 : index
    %c0_2 = arith.constant 0 : index
    %2 = vector.load %arg1[%c2, %c0_2] : memref<22x512xf32, #tpu.memory_space<vmem>>, vector<1x512xf32>
    %3 = arith.mulf %0, %1 : vector<1x512xf32>
    %4 = arith.mulf %1, %2 : vector<1x512xf32>
    %5 = arith.mulf %0, %2 : vector<1x512xf32>
    %6 = arith.mulf %0, %0 : vector<1x512xf32>
    %7 = arith.mulf %1, %1 : vector<1x512xf32>
    %8 = arith.mulf %2, %2 : vector<1x512xf32>
    %cst = arith.constant 0.282094806 : f32
    %9 = vector.broadcast %cst : f32 to vector<1x512xf32>
    %cst_3 = arith.constant -0.488602519 : f32
    %10 = vector.broadcast %cst_3 : f32 to vector<1x512xf32>
    %11 = arith.mulf %10, %1 : vector<1x512xf32>
    %cst_4 = arith.constant 0.488602519 : f32
    %12 = vector.broadcast %cst_4 : f32 to vector<1x512xf32>
    %13 = arith.mulf %12, %2 : vector<1x512xf32>
    %cst_5 = arith.constant -0.488602519 : f32
    %14 = vector.broadcast %cst_5 : f32 to vector<1x512xf32>
    %15 = arith.mulf %14, %0 : vector<1x512xf32>
    %cst_6 = arith.constant 1.09254849 : f32
    %16 = vector.broadcast %cst_6 : f32 to vector<1x512xf32>
    %17 = arith.mulf %16, %3 : vector<1x512xf32>
    %cst_7 = arith.constant -1.09254849 : f32
    %18 = vector.broadcast %cst_7 : f32 to vector<1x512xf32>
    %19 = arith.mulf %18, %4 : vector<1x512xf32>
    %cst_8 = arith.constant 0.946174681 : f32
    %20 = vector.broadcast %cst_8 : f32 to vector<1x512xf32>
    %21 = arith.mulf %20, %8 : vector<1x512xf32>
    %cst_9 = arith.constant 0.31539157 : f32
    %22 = vector.broadcast %cst_9 : f32 to vector<1x512xf32>
    %23 = arith.subf %21, %22 : vector<1x512xf32>
    %cst_10 = arith.constant -1.09254849 : f32
    %24 = vector.broadcast %cst_10 : f32 to vector<1x512xf32>
    %25 = arith.mulf %24, %5 : vector<1x512xf32>
    %cst_11 = arith.constant 0.546274245 : f32
    %26 = vector.broadcast %cst_11 : f32 to vector<1x512xf32>
    %27 = arith.mulf %26, %6 : vector<1x512xf32>
    %cst_12 = arith.constant 0.546274245 : f32
    %28 = vector.broadcast %cst_12 : f32 to vector<1x512xf32>
    %29 = arith.mulf %28, %7 : vector<1x512xf32>
    %30 = arith.subf %27, %29 : vector<1x512xf32>
    %cst_13 = arith.constant 0.590043604 : f32
    %31 = vector.broadcast %cst_13 : f32 to vector<1x512xf32>
    %32 = arith.mulf %31, %1 : vector<1x512xf32>
    %cst_14 = arith.constant -3.000000e+00 : f32
    %33 = vector.broadcast %cst_14 : f32 to vector<1x512xf32>
    %34 = arith.mulf %33, %6 : vector<1x512xf32>
    %35 = arith.addf %34, %7 : vector<1x512xf32>
    %36 = arith.mulf %32, %35 : vector<1x512xf32>
    %cst_15 = arith.constant 2.89061141 : f32
    %37 = vector.broadcast %cst_15 : f32 to vector<1x512xf32>
    %38 = arith.mulf %37, %3 : vector<1x512xf32>
    %39 = arith.mulf %38, %2 : vector<1x512xf32>
    %cst_16 = arith.constant 0.457045794 : f32
    %40 = vector.broadcast %cst_16 : f32 to vector<1x512xf32>
    %41 = arith.mulf %40, %1 : vector<1x512xf32>
    %cst_17 = arith.constant 5.000000e+00 : f32
    %42 = vector.broadcast %cst_17 : f32 to vector<1x512xf32>
    %43 = arith.mulf %42, %8 : vector<1x512xf32>
    %cst_18 = arith.constant 1.000000e+00 : f32
    %44 = vector.broadcast %cst_18 : f32 to vector<1x512xf32>
    %45 = arith.subf %44, %43 : vector<1x512xf32>
    %46 = arith.mulf %41, %45 : vector<1x512xf32>
    %cst_19 = arith.constant 0.373176336 : f32
    %47 = vector.broadcast %cst_19 : f32 to vector<1x512xf32>
    %48 = arith.mulf %47, %2 : vector<1x512xf32>
    %cst_20 = arith.constant 5.000000e+00 : f32
    %49 = vector.broadcast %cst_20 : f32 to vector<1x512xf32>
    %50 = arith.mulf %49, %8 : vector<1x512xf32>
    %cst_21 = arith.constant 3.000000e+00 : f32
    %51 = vector.broadcast %cst_21 : f32 to vector<1x512xf32>
    %52 = arith.subf %50, %51 : vector<1x512xf32>
    %53 = arith.mulf %48, %52 : vector<1x512xf32>
    %cst_22 = arith.constant 0.457045794 : f32
    %54 = vector.broadcast %cst_22 : f32 to vector<1x512xf32>
    %55 = arith.mulf %54, %0 : vector<1x512xf32>
    %cst_23 = arith.constant 5.000000e+00 : f32
    %56 = vector.broadcast %cst_23 : f32 to vector<1x512xf32>
    %57 = arith.mulf %56, %8 : vector<1x512xf32>
    %cst_24 = arith.constant 1.000000e+00 : f32
    %58 = vector.broadcast %cst_24 : f32 to vector<1x512xf32>
    %59 = arith.subf %58, %57 : vector<1x512xf32>
    %60 = arith.mulf %55, %59 : vector<1x512xf32>
    %cst_25 = arith.constant 1.44530571 : f32
    %61 = vector.broadcast %cst_25 : f32 to vector<1x512xf32>
    %62 = arith.mulf %61, %2 : vector<1x512xf32>
    %63 = arith.subf %6, %7 : vector<1x512xf32>
    %64 = arith.mulf %62, %63 : vector<1x512xf32>
    %cst_26 = arith.constant 0.590043604 : f32
    %65 = vector.broadcast %cst_26 : f32 to vector<1x512xf32>
    %66 = arith.mulf %65, %0 : vector<1x512xf32>
    %cst_27 = arith.constant 0.000000e+00 : f32
    %67 = vector.broadcast %cst_27 : f32 to vector<1x512xf32>
    %68 = arith.subf %67, %6 : vector<1x512xf32>
    %cst_28 = arith.constant 3.000000e+00 : f32
    %69 = vector.broadcast %cst_28 : f32 to vector<1x512xf32>
    %70 = arith.mulf %69, %7 : vector<1x512xf32>
    %71 = arith.addf %68, %70 : vector<1x512xf32>
    %72 = arith.mulf %66, %71 : vector<1x512xf32>
    %73 = tpu.concatenate %9, %11, %13, %15, %17, %19, %23, %25, %30, %36, %39, %46, %53, %60, %64, %72 in 0 : vector<1x512xf32>, vector<1x512xf32>, vector<1x512xf32>, vector<1x512xf32>, vector<1x512xf32>, vector<1x512xf32>, vector<1x512xf32>, vector<1x512xf32>, vector<1x512xf32>, vector<1x512xf32>, vector<1x512xf32>, vector<1x512xf32>, vector<1x512xf32>, vector<1x512xf32>, vector<1x512xf32>, vector<1x512xf32> -> vector<16x512xf32>
    %c0_29 = arith.constant 0 : index
    %c0_30 = arith.constant 0 : index
    %74 = vector.load %arg2[%c0_29, %c0_30] : memref<64x22xbf16, #tpu.memory_space<vmem>>, vector<64x22xbf16>
    %c0_31 = arith.constant 0 : index
    %c0_32 = arith.constant 0 : index
    %75 = vector.load %arg1[%c0_31, %c0_32] : memref<22x512xf32, #tpu.memory_space<vmem>>, vector<22x512xf32>
    %76 = arith.truncf %75 : vector<22x512xf32> to vector<22x512xbf16>
    %cst_33 = arith.constant dense<0.000000e+00> : vector<64x512xf32>
    %77 = tpu.matmul %74, %76, %cst_33 {dimension_numbers = #tpu.dot_dimension_numbers<[1], [0], [0], [1], [0, 0, 1, 1], [], []>} : vector<64x22xbf16>, vector<22x512xbf16>, vector<64x512xf32> -> vector<64x512xf32>
    %c0_34 = arith.constant 0 : index
    %c0_35 = arith.constant 0 : index
    %78 = vector.load %arg3[%c0_34, %c0_35] : memref<64x16xbf16, #tpu.memory_space<vmem>>, vector<64x16xbf16>
    %79 = arith.truncf %73 : vector<16x512xf32> to vector<16x512xbf16>
    %cst_36 = arith.constant dense<0.000000e+00> : vector<64x512xf32>
    %80 = tpu.matmul %78, %79, %cst_36 {dimension_numbers = #tpu.dot_dimension_numbers<[1], [0], [0], [1], [0, 0, 1, 1], [], []>} : vector<64x16xbf16>, vector<16x512xbf16>, vector<64x512xf32> -> vector<64x512xf32>
    %81 = arith.addf %77, %80 : vector<64x512xf32>
    %cst_37 = arith.constant 0.000000e+00 : f32
    %82 = vector.broadcast %cst_37 : f32 to vector<64x512xf32>
    %83 = arith.maximumf %81, %82 : vector<64x512xf32>
    %c0_38 = arith.constant 0 : index
    %c0_39 = arith.constant 0 : index
    %84 = vector.load %arg4[%c0_38, %c0_39] : memref<64x64xbf16, #tpu.memory_space<vmem>>, vector<64x64xbf16>
    %85 = arith.truncf %83 : vector<64x512xf32> to vector<64x512xbf16>
    %cst_40 = arith.constant dense<0.000000e+00> : vector<64x512xf32>
    %86 = tpu.matmul %84, %85, %cst_40 {dimension_numbers = #tpu.dot_dimension_numbers<[1], [0], [0], [1], [0, 0, 1, 1], [], []>} : vector<64x64xbf16>, vector<64x512xbf16>, vector<64x512xf32> -> vector<64x512xf32>
    %cst_41 = arith.constant 0.000000e+00 : f32
    %87 = vector.broadcast %cst_41 : f32 to vector<64x512xf32>
    %88 = arith.maximumf %86, %87 : vector<64x512xf32>
    %c0_42 = arith.constant 0 : index
    %c0_43 = arith.constant 0 : index
    %89 = vector.load %arg5[%c0_42, %c0_43] : memref<8x64xbf16, #tpu.memory_space<vmem>>, vector<8x64xbf16>
    %90 = arith.truncf %88 : vector<64x512xf32> to vector<64x512xbf16>
    %cst_44 = arith.constant dense<0.000000e+00> : vector<8x512xf32>
    %91 = tpu.matmul %89, %90, %cst_44 {dimension_numbers = #tpu.dot_dimension_numbers<[1], [0], [0], [1], [0, 0, 1, 1], [], []>} : vector<8x64xbf16>, vector<64x512xbf16>, vector<8x512xf32> -> vector<8x512xf32>
    %92 = vector.extract_strided_slice %91 {offsets = [0, 0], sizes = [3, 512], strides = [1, 1]} : vector<8x512xf32> to vector<3x512xf32>
    %93 = arith.negf %92 : vector<3x512xf32>
    %94 = math.exp %93 : vector<3x512xf32>
    %cst_45 = arith.constant 1.000000e+00 : f32
    %95 = vector.broadcast %cst_45 : f32 to vector<3x512xf32>
    %96 = arith.addf %95, %94 : vector<3x512xf32>
    %97 = arith.divf %95, %96 : vector<3x512xf32>
    %c0_46 = arith.constant 0 : index
    %c0_47 = arith.constant 0 : index
    %98 = vector.load %arg6[%c0_46, %c0_47] : memref<3x512xf32, #tpu.memory_space<vmem>>, vector<3x512xf32>
    tpu.vector_store %arg6[%c0_46, %c0_47], %97 {strides = array<i32>} : memref<3x512xf32, #tpu.memory_space<vmem>>, vector<3x512xf32>,
    return
  }
  func.func @transform_0(%arg0: i32) -> (i32, i32) {
    %c0_i32 = arith.constant 0 : i32
    %c0_i32_0 = arith.constant 0 : i32
    return %c0_i32, %arg0 : i32, i32
  }
  func.func @transform_1(%arg0: i32) -> (i32, i32) {
    %c0_i32 = arith.constant 0 : i32
    %c0_i32_0 = arith.constant 0 : i32
    %c0_i32_1 = arith.constant 0 : i32
    return %c0_i32, %c0_i32_0 : i32, i32
  }
  func.func @transform_2(%arg0: i32) -> (i32, i32) {
    %c0_i32 = arith.constant 0 : i32
    %c0_i32_0 = arith.constant 0 : i32
    %c0_i32_1 = arith.constant 0 : i32
    return %c0_i32, %c0_i32_0 : i32, i32
  }
  func.func @transform_3(%arg0: i32) -> (i32, i32) {
    %c0_i32 = arith.constant 0 : i32
    %c0_i32_0 = arith.constant 0 : i32
    %c0_i32_1 = arith.constant 0 : i32
    return %c0_i32, %c0_i32_0 : i32, i32
  }
  func.func @transform_4(%arg0: i32) -> (i32, i32) {
    %c0_i32 = arith.constant 0 : i32
    %c0_i32_0 = arith.constant 0 : i32
    %c0_i32_1 = arith.constant 0 : i32
    return %c0_i32, %c0_i32_0 : i32, i32
  }
  func.func @transform_5(%arg0: i32) -> (i32, i32) {
    %c0_i32 = arith.constant 0 : i32
    %c0_i32_0 = arith.constant 0 : i32
    return %c0_i32, %arg0 : i32, i32
  }
}

</mosaic_0001>

<llo_original>
// kernel: tpu_custom_call.1
$region0: #{tpu_custom_call.1}
  #allocation0 [shape = 'u32[]', space=smem, size = 0x4, offset = 0x4, fixed_abs, tag = 'smem constant byte address 0x4 - core index']
  #allocation1 [shape = 'u32[144,128]{1,0:T(1,128)}', space=vmem, size = 0x12000, scoped, tag = 'internal scratch']
  %s0 = inlined_call_operand.hbm [shape: f32[22,1024], index: 0, kind: input, shape index: {}]
  %s1 = inlined_call_operand.vmem [shape: bf16[64,22], index: 1, kind: input, shape index: {}]
  %s2 = inlined_call_operand.vmem [shape: bf16[64,16], index: 2, kind: input, shape index: {}]
  %s3 = inlined_call_operand.vmem [shape: bf16[64,64], index: 3, kind: input, shape index: {}]
  %s4 = inlined_call_operand.vmem [shape: bf16[8,64], index: 4, kind: input, shape index: {}]
  %s5 = inlined_call_operand.hbm [shape: f32[3,1024], index: 5, kind: output, shape index: {}]
  %s6 = sld [smem:[#allocation0]]
  $region57: #{tpu_custom_call.1} parent=0
    _
  %s8 = ssub.s32 1, %s6
  %s9 = scalar_select 0, %s8, %s6
  $region1: #{tpu_custom_call.1} parent=0
    #allocation2 [shape = 'u8[98304]{0}', space=vmem, size = 0x18000, scoped, tag = 'input window, operand 0']
    #allocation3 [shape = 's32[2]{0}', space=sflag, size = 0x8, scoped, tag = 'scoped memory for tpu_custom_call.1']
    #allocation4 [shape = 's32[2]{0}', space=sflag, size = 0x8, scoped, tag = 'scoped memory for tpu_custom_call.1']
    #allocation5 [shape = 'u8[16384]{0}', space=vmem, size = 0x4000, scoped, tag = 'output window, operand 0']
    %10 = vsyncpa [#allocation3], 0
    %s11 = scalar_lea.sflag [#allocation3], 1
    %12 = vsyncpa %s11, 0
    %13 = vsyncpa [#allocation4], 0
    %s14 = scalar_lea.sflag [#allocation4], 1
    %15 = vsyncpa %s14, 0
    loop: start=0, step=1, limit=4
    $region2: #{tpu_custom_call.1} parent=1 // loop_pre_header
      _
    $region3: #{tpu_custom_call.1} parent=1 // loop_header
      %s17 = sphi 0, %s21
      %p18 = scmp.ge.s32.totalorder %s17, 4
      %s27 = sphi 0, %s29
      %s30 = sphi 0, %s27
      %s31 = sphi 0, %s30
      %s47 = sphi 0, %s31
      %s51 = sphi 0, %s51
      %s53 = sphi 0, %s51
      %s54 = sphi 0, %s53
      %s68 = sphi 0, %s54
      %s72 = sphi 0, %s72
      %s74 = sphi 0, %s72
      %s75 = sphi 0, %s74
      %s89 = sphi 0, %s75
      %s93 = sphi 0, %s93
      %s95 = sphi 0, %s93
      %s96 = sphi 0, %s95
      %s110 = sphi 0, %s96
      %s114 = sphi 0, %s114
      %s116 = sphi 0, %s114
      %s117 = sphi 0, %s116
      %s131 = sphi 0, %s117
      %s137 = sphi 0, %s139
      %s140 = sphi 0, %s137
      %s141 = sphi 0, %s140
      %s157 = sphi 0, %s141
    $region4: #{tpu_custom_call.1} parent=1 // loop_header_branch
      %20 = sbr.rel (%p18) target = $region8
    $region5: #{tpu_custom_call.1} parent=1 // loop_body
      %s22 = ssub.s32 %s17, 1
      %s23 = ssub.s32 %s17, 2
      %s24 = sadd.s32 %s17, 1
      %s25 = ssub.s32 %s17, %s24
      %p26 = scmp.eq.s32.totalorder %s25, 0
      %s28 = sadd.s32 %s27, 1
      %s29 = scalar_select %p26, %s27, %s28
      %p32 = pneg %p26
      %p33 = scmp.eq.s32.totalorder %s17, 1
      %p34 = por %p32, %p33
      %p35 = scmp.ne.s32.totalorder %s27, %s30
      %p36 = scmp.eq.s32.totalorder %s17, 0
      %p37 = por %p35, %p36
      %p38 = scmp.ne.s32.totalorder %s27, %s30
      %p39 = scmp.eq.s32.totalorder %s22, 1
      %p40 = por %p38, %p39
      %p41 = scmp.ne.s32.totalorder %s30, %s31
      %p42 = scmp.eq.s32.totalorder %s22, 0
      %p43 = por %p41, %p42
      %p44 = scmp.ne.s32.totalorder %s30, %s31
      %p45 = scmp.eq.s32.totalorder %s23, 1
      %p46 = por %p44, %p45
      %p48 = scmp.ne.s32.totalorder %s31, %s47
      %p49 = scmp.eq.s32.totalorder %s23, 0
      %p50 = por %p48, %p49
      %s52 = sadd.s32 %s51, 1
      %p55 = scmp.eq.s32.totalorder %s17, 1
      %p56 = scmp.ne.s32.totalorder %s51, %s53
      %p57 = scmp.eq.s32.totalorder %s17, 0
      %p58 = por %p56, %p57
      %p59 = scmp.ne.s32.totalorder %s51, %s53
      %p60 = scmp.eq.s32.totalorder %s22, 1
      %p61 = por %p59, %p60
      %p62 = scmp.ne.s32.totalorder %s53, %s54
      %p63 = scmp.eq.s32.totalorder %s22, 0
      %p64 = por %p62, %p63
      %p65 = scmp.ne.s32.totalorder %s53, %s54
      %p66 = scmp.eq.s32.totalorder %s23, 1
      %p67 = por %p65, %p66
      %p69 = scmp.ne.s32.totalorder %s54, %s68
      %p70 = scmp.eq.s32.totalorder %s23, 0
      %p71 = por %p69, %p70
      %s73 = sadd.s32 %s72, 1
      %p76 = scmp.eq.s32.totalorder %s17, 1
      %p77 = scmp.ne.s32.totalorder %s72, %s74
      %p78 = scmp.eq.s32.totalorder %s17, 0
      %p79 = por %p77, %p78
      %p80 = scmp.ne.s32.totalorder %s72, %s74
      %p81 = scmp.eq.s32.totalorder %s22, 1
      %p82 = por %p80, %p81
      %p83 = scmp.ne.s32.totalorder %s74, %s75
      %p84 = scmp.eq.s32.totalorder %s22, 0
      %p85 = por %p83, %p84
      %p86 = scmp.ne.s32.totalorder %s74, %s75
      %p87 = scmp.eq.s32.totalorder %s23, 1
      %p88 = por %p86, %p87
      %p90 = scmp.ne.s32.totalorder %s75, %s89
      %p91 = scmp.eq.s32.totalorder %s23, 0
      %p92 = por %p90, %p91
      %s94 = sadd.s32 %s93, 1
      %p97 = scmp.eq.s32.totalorder %s17, 1
      %p98 = scmp.ne.s32.totalorder %s93, %s95
      %p99 = scmp.eq.s32.totalorder %s17, 0
      %p100 = por %p98, %p99
      %p101 = scmp.ne.s32.totalorder %s93, %s95
      %p102 = scmp.eq.s32.totalorder %s22, 1
      %p103 = por %p101, %p102
      %p104 = scmp.ne.s32.totalorder %s95, %s96
      %p105 = scmp.eq.s32.totalorder %s22, 0
      %p106 = por %p104, %p105
      %p107 = scmp.ne.s32.totalorder %s95, %s96
      %p108 = scmp.eq.s32.totalorder %s23, 1
      %p109 = por %p107, %p108
      %p111 = scmp.ne.s32.totalorder %s96, %s110
      %p112 = scmp.eq.s32.totalorder %s23, 0
      %p113 = por %p111, %p112
      %s115 = sadd.s32 %s114, 1
      %p118 = scmp.eq.s32.totalorder %s17, 1
      %p119 = scmp.ne.s32.totalorder %s114, %s116
      %p120 = scmp.eq.s32.totalorder %s17, 0
      %p121 = por %p119, %p120
      %p122 = scmp.ne.s32.totalorder %s114, %s116
      %p123 = scmp.eq.s32.totalorder %s22, 1
      %p124 = por %p122, %p123
      %p125 = scmp.ne.s32.totalorder %s116, %s117
      %p126 = scmp.eq.s32.totalorder %s22, 0
      %p127 = por %p125, %p126
      %p128 = scmp.ne.s32.totalorder %s116, %s117
      %p129 = scmp.eq.s32.totalorder %s23, 1
      %p130 = por %p128, %p129
      %p132 = scmp.ne.s32.totalorder %s117, %s131
      %p133 = scmp.eq.s32.totalorder %s23, 0
      %p134 = por %p132, %p133
      %s135 = ssub.s32 %s17, %s24
      %p136 = scmp.eq.s32.totalorder %s135, 0
      %s138 = sadd.s32 %s137, 1
      %s139 = scalar_select %p136, %s137, %s138
      %p142 = pneg %p136
      %p143 = scmp.eq.s32.totalorder %s17, 1
      %p144 = por %p142, %p143
      %p145 = scmp.ne.s32.totalorder %s137, %s140
      %p146 = scmp.eq.s32.totalorder %s17, 0
      %p147 = por %p145, %p146
      %p148 = scmp.ne.s32.totalorder %s137, %s140
      %p149 = scmp.eq.s32.totalorder %s22, 1
      %p150 = por %p148, %p149
      %p151 = scmp.ne.s32.totalorder %s140, %s141
      %p152 = scmp.eq.s32.totalorder %s22, 0
      %p153 = por %p151, %p152
      %p154 = scmp.ne.s32.totalorder %s140, %s141
      %p155 = scmp.eq.s32.totalorder %s23, 1
      %p156 = por %p154, %p155
      %p158 = scmp.ne.s32.totalorder %s141, %s157
      %p159 = scmp.eq.s32.totalorder %s23, 0
      %p160 = por %p158, %p159
      %p161 = scmp.le.s32.totalorder 1, %s17
      %p162 = scmp.lt.s32.totalorder %s17, 3
      %p163 = pnand %p161, %p162
      %p164 = pneg %p163
      // Predicated region
      $region9: #{tpu_custom_call.1} parent=5 // pred_check
        _
      $region10: #{tpu_custom_call.1} parent=5 // pred_check_branch
        %166 = sbr.rel (%p163) target = $region12
      $region11: #{tpu_custom_call.1} parent=5 // pred_region
        %s167 = ssub.s32 %s17, 1
        // Predicated region
        $region13: #{tpu_custom_call.1} parent=11 // pred_check
          %p168 = pneg %p64
        $region14: #{tpu_custom_call.1} parent=11 // pred_check_branch
          %170 = sbr.rel (%p168) target = $region16
        $region15: #{tpu_custom_call.1} parent=11 // pred_region
          _
        $region16: #{tpu_custom_call.1} parent=11 // pred_fallthru
          _
        // Predicated region
        $region17: #{tpu_custom_call.1} parent=11 // pred_check
          %p171 = pneg %p85
        $region18: #{tpu_custom_call.1} parent=11 // pred_check_branch
          %173 = sbr.rel (%p171) target = $region20
        $region19: #{tpu_custom_call.1} parent=11 // pred_region
          _
        $region20: #{tpu_custom_call.1} parent=11 // pred_fallthru
          _
        // Predicated region
        $region21: #{tpu_custom_call.1} parent=11 // pred_check
          %p174 = pneg %p106
        $region22: #{tpu_custom_call.1} parent=11 // pred_check_branch
          %176 = sbr.rel (%p174) target = $region24
        $region23: #{tpu_custom_call.1} parent=11 // pred_region
          _
        $region24: #{tpu_custom_call.1} parent=11 // pred_fallthru
          _
        // Predicated region
        $region25: #{tpu_custom_call.1} parent=11 // pred_check
          %p177 = pneg %p127
        $region26: #{tpu_custom_call.1} parent=11 // pred_check_branch
          %179 = sbr.rel (%p177) target = $region28
        $region27: #{tpu_custom_call.1} parent=11 // pred_region
          _
        $region28: #{tpu_custom_call.1} parent=11 // pred_fallthru
          _
      $region12: #{tpu_custom_call.1} parent=5 // pred_fallthru
        _
      %p180 = scmp.lt.s32.totalorder %s17, 2
      // Predicated region
      $region29: #{tpu_custom_call.1} parent=5 // pred_check
        %p181 = pneg %p180
      $region30: #{tpu_custom_call.1} parent=5 // pred_check_branch
        %183 = sbr.rel (%p181) target = $region32
      $region31: #{tpu_custom_call.1} parent=5 // pred_region
        // Predicated region
        $region33: #{tpu_custom_call.1} parent=31 // pred_check
          %p184 = pneg %p37
        $region34: #{tpu_custom_call.1} parent=31 // pred_check_branch
          %186 = sbr.rel (%p184) target = $region36
        $region35: #{tpu_custom_call.1} parent=31 // pred_region
          %s187 = sand.u32 %s27, 1
          %s188 = scalar_lea.sflag [#allocation3], %s187
          %s189 = sand.u32 %s27, 1
          %s190 = smul.addr %s189, 96
          %s191 = scalar_lea.vmem [#allocation2], %s190
          %s192 = smul.u32 4, %s17
          %s194 = ssub.s32 1536, 1536
          %195 = vsyncadd %s188, %s194
          %s196 = smul.addr %s192, 128
          %s197 = scalar_lea.hbm %s0, %s196
          %s198 = sshll.u32 %s191, 4
          %s199 = int_to_ptr.vmem [resolvable:$true] %s198
          %204 = dma.hbm_to_vmem [thread:$0]  %s197, 1536, %s199, %s188, 1024, 512, 32
        $region36: #{tpu_custom_call.1} parent=31 // pred_fallthru
          _
      $region32: #{tpu_custom_call.1} parent=5 // pred_fallthru
        _
      %p205 = scmp.le.s32.totalorder 1, %s17
      %p206 = scmp.lt.s32.totalorder %s17, 3
      %p207 = pnand %p205, %p206
      %p208 = pneg %p207
      // Predicated region
      $region37: #{tpu_custom_call.1} parent=5 // pred_check
        _
      $region38: #{tpu_custom_call.1} parent=5 // pred_check_branch
        %210 = sbr.rel (%p207) target = $region40
      $region39: #{tpu_custom_call.1} parent=5 // pred_region
        %s211 = ssub.s32 %s17, 1
        %s212 = sand.u32 %s30, 1
        %s213 = scalar_lea.sflag [#allocation3], %s212
        %s214 = sand.u32 %s30, 1
        %s215 = smul.addr %s214, 96
        %s216 = scalar_lea.vmem [#allocation2], %s215
        // Predicated region
        $region41: #{tpu_custom_call.1} parent=39 // pred_check
          %p217 = pneg %p43
        $region42: #{tpu_custom_call.1} parent=39 // pred_check_branch
          %219 = sbr.rel (%p217) target = $region44
        $region43: #{tpu_custom_call.1} parent=39 // pred_region
          %220 = dma.done %s213, 1536
        $region44: #{tpu_custom_call.1} parent=39 // pred_fallthru
          _
        %s221 = sand.u32 %s30, 1
        %s222 = scalar_lea.sflag [#allocation3], %s221
        %s223 = sand.u32 %s30, 1
        %s224 = smul.addr %s223, 96
        %s225 = scalar_lea.vmem [#allocation2], %s224
        %p226 = pneg %p43
        %p227 = pneg %p40
        %p228 = pneg %p64
        %p229 = pneg %p61
        %p230 = pneg %p85
        %p231 = pneg %p82
        %p232 = pneg %p106
        %p233 = pneg %p103
        %p234 = pneg %p127
        %p235 = pneg %p124
        %p236 = pneg %p153
        %p237 = pneg %p150
        %s238 = sand.u32 %s140, 1
        %s239 = scalar_lea.sflag [#allocation4], %s238
        %s240 = sand.u32 %s140, 1
        %s241 = smul.addr %s240, 16
        %s242 = scalar_lea.vmem [#allocation5], %s241
        %s243 = smul.u32 4, %s22
        %s244 = smul.u32 4, %s22
        %v246 = vld [vmem:[%s216] ss:$8 sm:$0xf]
        %s247 = scalar_lea.vmem %s216, 1 [#allocation2]
        %v248 = vld [vmem:[%s247] ss:$8 sm:$0xf]
        %s249 = scalar_lea.vmem %s216, 2 [#allocation2]
        %v250 = vld [vmem:[%s249] ss:$8 sm:$0xf]
        %v251 = vmul.f32 %v246, %v248
        %v252 = vmul.f32 %v248, %v250
        %v253 = vmul.f32 %v246, %v250
        %v254 = vmul.f32 %v246, %v246
        %v255 = vmul.f32 %v248, %v248
        %v256 = vmul.f32 %v250, %v250
        %v257 = vmul.f32 %v248, -0.48860252
        %v258 = vmul.f32 %v250, 0.48860252
        %v259 = vmul.f32 %v246, -0.48860252
        %v260 = vmul.f32 %v251, 1.0925485
        %v261 = vmul.f32 %v252, -1.0925485
        %v262 = vmul.f32 %v256, 0.9461747
        %v263 = vsub.f32 %v262, 0.31539157
        %v264 = vmul.f32 %v253, -1.0925485
        %v265 = vmul.f32 %v254, 0.54627424
        %v266 = vmul.f32 %v255, 0.54627424
        %v267 = vsub.f32 %v265, %v266
        %v268 = vmul.f32 %v248, 0.5900436
        %v269 = vmul.f32 %v254, -3.0
        %v270 = vadd.f32 %v269, %v255
        %v271 = vmul.f32 %v268, %v270
        %v272 = vmul.f32 %v251, 2.8906114
        %v273 = vmul.f32 %v272, %v250
        %v274 = vmul.f32 %v248, 0.4570458
        %v275 = vmul.f32 %v256, 5.0
        %v276 = vsub.f32 1.0, %v275
        %v277 = vmul.f32 %v274, %v276
        %v278 = vmul.f32 %v250, 0.37317634
        %v279 = vsub.f32 %v275, 3.0
        %v280 = vmul.f32 %v278, %v279
        %v281 = vmul.f32 %v246, 0.4570458
        %v282 = vmul.f32 %v281, %v276
        %v283 = vmul.f32 %v250, 1.4453057
        %v284 = vsub.f32 %v254, %v255
        %v285 = vmul.f32 %v283, %v284
        %v286 = vmul.f32 %v246, 0.5900436
        %v287 = vsub.f32 0.0, %v254
        %v288 = vmul.f32 %v255, 3.0
        %v289 = vadd.f32 %v287, %v288
        %v290 = vmul.f32 %v286, %v289
        %v292 = vlaneseq
        %v293 = vshrl.u32 %v292, 7
        %v294 = vsub.s32 0, %v293
        %v295 = vrot.slane %v257, %v294
        %v296 = vlaneseq
        %v297 = vshrl.u32 %v296, 7
        %v298 = vsub.s32 1, %v297
        %v299 = vrot.slane %v257, %v298
        %v300 = vlaneseq
        %v301 = vshrl.u32 %v300, 7
        %v302 = vsub.s32 2, %v301
        %v303 = vrot.slane %v257, %v302
        %v304 = vlaneseq
        %v305 = vshrl.u32 %v304, 7
        %v306 = vsub.s32 3, %v305
        %v307 = vrot.slane %v257, %v306
        %v313 = vlaneseq
        %v314 = vshrl.u32 %v313, 7
        %v315 = vsub.s32 0, %v314
        %v316 = vrot.slane %v258, %v315
        %v317 = vlaneseq
        %v318 = vshrl.u32 %v317, 7
        %v319 = vsub.s32 1, %v318
        %v320 = vrot.slane %v258, %v319
        %v321 = vlaneseq
        %v322 = vshrl.u32 %v321, 7
        %v323 = vsub.s32 2, %v322
        %v324 = vrot.slane %v258, %v323
        %v325 = vlaneseq
        %v326 = vshrl.u32 %v325, 7
        %v327 = vsub.s32 3, %v326
        %v328 = vrot.slane %v258, %v327
        %v334 = vlaneseq
        %v335 = vshrl.u32 %v334, 7
        %v336 = vsub.s32 0, %v335
        %v337 = vrot.slane %v259, %v336
        %v338 = vlaneseq
        %v339 = vshrl.u32 %v338, 7
        %v340 = vsub.s32 1, %v339
        %v341 = vrot.slane %v259, %v340
        %v342 = vlaneseq
        %v343 = vshrl.u32 %v342, 7
        %v344 = vsub.s32 2, %v343
        %v345 = vrot.slane %v259, %v344
        %v346 = vlaneseq
        %v347 = vshrl.u32 %v346, 7
        %v348 = vsub.s32 3, %v347
        %v349 = vrot.slane %v259, %v348
        %v355 = vlaneseq
        %v356 = vshrl.u32 %v355, 7
        %v357 = vsub.s32 0, %v356
        %v358 = vrot.slane %v260, %v357
        %v359 = vlaneseq
        %v360 = vshrl.u32 %v359, 7
        %v361 = vsub.s32 1, %v360
        %v362 = vrot.slane %v260, %v361
        %v363 = vlaneseq
        %v364 = vshrl.u32 %v363, 7
        %v365 = vsub.s32 2, %v364
        %v366 = vrot.slane %v260, %v365
        %v367 = vlaneseq
        %v368 = vshrl.u32 %v367, 7
        %v369 = vsub.s32 3, %v368
        %v370 = vrot.slane %v260, %v369
        %v376 = vlaneseq
        %v377 = vshrl.u32 %v376, 7
        %v378 = vsub.s32 0, %v377
        %v379 = vrot.slane %v261, %v378
        %v380 = vlaneseq
        %v381 = vshrl.u32 %v380, 7
        %v382 = vsub.s32 1, %v381
        %v383 = vrot.slane %v261, %v382
        %v384 = vlaneseq
        %v385 = vshrl.u32 %v384, 7
        %v386 = vsub.s32 2, %v385
        %v387 = vrot.slane %v261, %v386
        %v388 = vlaneseq
        %v389 = vshrl.u32 %v388, 7
        %v390 = vsub.s32 3, %v389
        %v391 = vrot.slane %v261, %v390
        %v397 = vlaneseq
        %v398 = vshrl.u32 %v397, 7
        %v399 = vsub.s32 0, %v398
        %v400 = vrot.slane %v263, %v399
        %v401 = vlaneseq
        %v402 = vshrl.u32 %v401, 7
        %v403 = vsub.s32 1, %v402
        %v404 = vrot.slane %v263, %v403
        %v405 = vlaneseq
        %v406 = vshrl.u32 %v405, 7
        %v407 = vsub.s32 2, %v406
        %v408 = vrot.slane %v263, %v407
        %v409 = vlaneseq
        %v410 = vshrl.u32 %v409, 7
        %v411 = vsub.s32 3, %v410
        %v412 = vrot.slane %v263, %v411
        %v418 = vlaneseq
        %v419 = vshrl.u32 %v418, 7
        %v420 = vsub.s32 0, %v419
        %v421 = vrot.slane %v264, %v420
        %v422 = vlaneseq
        %v423 = vshrl.u32 %v422, 7
        %v424 = vsub.s32 1, %v423
        %v425 = vrot.slane %v264, %v424
        %v426 = vlaneseq
        %v427 = vshrl.u32 %v426, 7
        %v428 = vsub.s32 2, %v427
        %v429 = vrot.slane %v264, %v428
        %v430 = vlaneseq
        %v431 = vshrl.u32 %v430, 7
        %v432 = vsub.s32 3, %v431
        %v433 = vrot.slane %v264, %v432
        %v439 = vlaneseq
        %v440 = vshrl.u32 %v439, 7
        %v441 = vsub.s32 0, %v440
        %v442 = vrot.slane %v267, %v441
        %v443 = vlaneseq
        %v444 = vshrl.u32 %v443, 7
        %v445 = vsub.s32 1, %v444
        %v446 = vrot.slane %v267, %v445
        %v447 = vlaneseq
        %v448 = vshrl.u32 %v447, 7
        %v449 = vsub.s32 2, %v448
        %v450 = vrot.slane %v267, %v449
        %v451 = vlaneseq
        %v452 = vshrl.u32 %v451, 7
        %v453 = vsub.s32 3, %v452
        %v454 = vrot.slane %v267, %v453
        %v460 = vlaneseq
        %v461 = vshrl.u32 %v460, 7
        %v462 = vsub.s32 0, %v461
        %v463 = vrot.slane %v271, %v462
        %v464 = vlaneseq
        %v465 = vshrl.u32 %v464, 7
        %v466 = vsub.s32 1, %v465
        %v467 = vrot.slane %v271, %v466
        %v468 = vlaneseq
        %v469 = vshrl.u32 %v468, 7
        %v470 = vsub.s32 2, %v469
        %v471 = vrot.slane %v271, %v470
        %v472 = vlaneseq
        %v473 = vshrl.u32 %v472, 7
        %v474 = vsub.s32 3, %v473
        %v475 = vrot.slane %v271, %v474
        %v481 = vlaneseq
        %v482 = vshrl.u32 %v481, 7
        %v483 = vsub.s32 0, %v482
        %v484 = vrot.slane %v273, %v483
        %v485 = vlaneseq
        %v486 = vshrl.u32 %v485, 7
        %v487 = vsub.s32 1, %v486
        %v488 = vrot.slane %v273, %v487
        %v489 = vlaneseq
        %v490 = vshrl.u32 %v489, 7
        %v491 = vsub.s32 2, %v490
        %v492 = vrot.slane %v273, %v491
        %v493 = vlaneseq
        %v494 = vshrl.u32 %v493, 7
        %v495 = vsub.s32 3, %v494
        %v496 = vrot.slane %v273, %v495
        %v502 = vlaneseq
        %v503 = vshrl.u32 %v502, 7
        %v504 = vsub.s32 0, %v503
        %v505 = vrot.slane %v277, %v504
        %v506 = vlaneseq
        %v507 = vshrl.u32 %v506, 7
        %v508 = vsub.s32 1, %v507
        %v509 = vrot.slane %v277, %v508
        %v510 = vlaneseq
        %v511 = vshrl.u32 %v510, 7
        %v512 = vsub.s32 2, %v511
        %v513 = vrot.slane %v277, %v512
        %v514 = vlaneseq
        %v515 = vshrl.u32 %v514, 7
        %v516 = vsub.s32 3, %v515
        %v517 = vrot.slane %v277, %v516
        %v523 = vlaneseq
        %v524 = vshrl.u32 %v523, 7
        %v525 = vsub.s32 0, %v524
        %v526 = vrot.slane %v280, %v525
        %v527 = vlaneseq
        %v528 = vshrl.u32 %v527, 7
        %v529 = vsub.s32 1, %v528
        %v530 = vrot.slane %v280, %v529
        %v531 = vlaneseq
        %v532 = vshrl.u32 %v531, 7
        %v533 = vsub.s32 2, %v532
        %v534 = vrot.slane %v280, %v533
        %v535 = vlaneseq
        %v536 = vshrl.u32 %v535, 7
        %v537 = vsub.s32 3, %v536
        %v538 = vrot.slane %v280, %v537
        %v544 = vlaneseq
        %v545 = vshrl.u32 %v544, 7
        %v546 = vsub.s32 0, %v545
        %v547 = vrot.slane %v282, %v546
        %v548 = vlaneseq
        %v549 = vshrl.u32 %v548, 7
        %v550 = vsub.s32 1, %v549
        %v551 = vrot.slane %v282, %v550
        %v552 = vlaneseq
        %v553 = vshrl.u32 %v552, 7
        %v554 = vsub.s32 2, %v553
        %v555 = vrot.slane %v282, %v554
        %v556 = vlaneseq
        %v557 = vshrl.u32 %v556, 7
        %v558 = vsub.s32 3, %v557
        %v559 = vrot.slane %v282, %v558
        %v565 = vlaneseq
        %v566 = vshrl.u32 %v565, 7
        %v567 = vsub.s32 0, %v566
        %v568 = vrot.slane %v285, %v567
        %v569 = vlaneseq
        %v570 = vshrl.u32 %v569, 7
        %v571 = vsub.s32 1, %v570
        %v572 = vrot.slane %v285, %v571
        %v573 = vlaneseq
        %v574 = vshrl.u32 %v573, 7
        %v575 = vsub.s32 2, %v574
        %v576 = vrot.slane %v285, %v575
        %v577 = vlaneseq
        %v578 = vshrl.u32 %v577, 7
        %v579 = vsub.s32 3, %v578
        %v580 = vrot.slane %v285, %v579
        %v586 = vlaneseq
        %v587 = vshrl.u32 %v586, 7
        %v588 = vsub.s32 0, %v587
        %v589 = vrot.slane %v290, %v588
        %v590 = vlaneseq
        %v591 = vshrl.u32 %v590, 7
        %v592 = vsub.s32 1, %v591
        %v593 = vrot.slane %v290, %v592
        %v594 = vlaneseq
        %v595 = vshrl.u32 %v594, 7
        %v596 = vsub.s32 2, %v595
        %v597 = vrot.slane %v290, %v596
        %v598 = vlaneseq
        %v599 = vshrl.u32 %v598, 7
        %v600 = vsub.s32 3, %v599
        %v601 = vrot.slane %v290, %v600
        %vm606 = vcmask 1040384
        %v607 = vsel %vm606, 0.2820948, %v295
        %v608 = vsel %vm606, 0.2820948, %v299
        %v609 = vsel %vm606, 0.2820948, %v303
        %v610 = vsel %vm606, 0.2820948, %v307
        %vm611 = vcmask 1041408
        %v612 = vsel %vm611, %v607, %v316
        %v613 = vsel %vm611, %v608, %v320
        %v614 = vsel %vm611, %v609, %v324
        %v615 = vsel %vm611, %v610, %v328
        %vm616 = vcmask 1042432
        %v617 = vsel %vm616, %v612, %v337
        %v618 = vsel %vm616, %v613, %v341
        %v619 = vsel %vm616, %v614, %v345
        %v620 = vsel %vm616, %v615, %v349
        %vm621 = vcmask 1043456
        %v622 = vsel %vm621, %v617, %v358
        %v623 = vsel %vm621, %v618, %v362
        %v624 = vsel %vm621, %v619, %v366
        %v625 = vsel %vm621, %v620, %v370
        %vm626 = vcmask 1044480
        %v627 = vsel %vm626, %v622, %v379
        %v628 = vsel %vm626, %v623, %v383
        %v629 = vsel %vm626, %v624, %v387
        %v630 = vsel %vm626, %v625, %v391
        %vm631 = vcmask 1045504
        %v632 = vsel %vm631, %v627, %v400
        %v633 = vsel %vm631, %v628, %v404
        %v634 = vsel %vm631, %v629, %v408
        %v635 = vsel %vm631, %v630, %v412
        %vm636 = vcmask 1046528
        %v637 = vsel %vm636, %v632, %v421
        %v638 = vsel %vm636, %v633, %v425
        %v639 = vsel %vm636, %v634, %v429
        %v640 = vsel %vm636, %v635, %v433
        %v641 = vsel %vm606, %v442, %v463
        %v642 = vsel %vm606, %v446, %v467
        %v643 = vsel %vm606, %v450, %v471
        %v644 = vsel %vm606, %v454, %v475
        %v645 = vsel %vm611, %v641, %v484
        %v646 = vsel %vm611, %v642, %v488
        %v647 = vsel %vm611, %v643, %v492
        %v648 = vsel %vm611, %v644, %v496
        %v649 = vsel %vm616, %v645, %v505
        %v650 = vsel %vm616, %v646, %v509
        %v651 = vsel %vm616, %v647, %v513
        %v652 = vsel %vm616, %v648, %v517
        %v653 = vsel %vm621, %v649, %v526
        %v654 = vsel %vm621, %v650, %v530
        %v655 = vsel %vm621, %v651, %v534
        %v656 = vsel %vm621, %v652, %v538
        %v657 = vsel %vm626, %v653, %v547
        %v658 = vsel %vm626, %v654, %v551
        %v659 = vsel %vm626, %v655, %v555
        %v660 = vsel %vm626, %v656, %v559
        %v661 = vsel %vm631, %v657, %v568
        %v662 = vsel %vm631, %v658, %v572
        %v663 = vsel %vm631, %v659, %v576
        %v664 = vsel %vm631, %v660, %v580
        %v665 = vsel %vm636, %v661, %v589
        %v666 = vsel %vm636, %v662, %v593
        %v667 = vsel %vm636, %v663, %v597
        %v668 = vsel %vm636, %v664, %v601
        %v669 = vld [vmem:[%s1] sm:$0xf]
        %v670 = vld [vmem:[%s1 + $0x4] sm:$0xf]
        %v671 = vld [vmem:[%s1 + $0x8] sm:$0xf]
        %v672 = vld [vmem:[%s1 + $0xc] sm:$0xf]
        %v673 = vld [vmem:[%s1 + $0x10] sm:$0xf]
        %v674 = vld [vmem:[%s1 + $0x14] sm:$0xf]
        %v675 = vld [vmem:[%s1 + $0x18] sm:$0xf]
        %v676 = vld [vmem:[%s1 + $0x1c] sm:$0xf]
        %v677 = vld [vmem:[%s216] sm:$0xff]
        %v678 = vld [vmem:[%s216 + $0x8] sm:$0xff]
        %v679 = vld [vmem:[%s216 + $0x10] sm:$0xff]
        %v680 = vld [vmem:[%s216 + $0x18] sm:$0xff]
        %v681 = vld [vmem:[%s216 + $0x20] sm:$0xff]
        %v682 = vld [vmem:[%s216 + $0x28] sm:$0xff]
        %v683 = vld [vmem:[%s216 + $0x30] sm:$0xff]
        %v684 = vld [vmem:[%s216 + $0x38] sm:$0xff]
        %v685 = vld [vmem:[%s216 + $0x40] sm:$0x3f]
        %v686 = vld [vmem:[%s216 + $0x48] sm:$0x3f]
        %v687 = vld [vmem:[%s216 + $0x50] sm:$0x3f]
        %v688 = vld [vmem:[%s216 + $0x58] sm:$0x3f]
        %v689 = vpack.c.bf16 %v681, %v677
        %v690 = vpack.c.bf16 %v682, %v678
        %v691 = vpack.c.bf16 %v683, %v679
        %v692 = vpack.c.bf16 %v684, %v680
        %v693 = vpack.c.bf16 %v685, %v685
        %v694 = vpack.c.bf16 %v686, %v686
        %v695 = vpack.c.bf16 %v687, %v687
        %v696 = vpack.c.bf16 %v688, %v688
        %v697 = vld [vmem:[%s2] sm:$0xf]
        %v698 = vld [vmem:[%s2 + $0x4] sm:$0xf]
        %v699 = vld [vmem:[%s2 + $0x8] sm:$0xf]
        %v700 = vld [vmem:[%s2 + $0xc] sm:$0xf]
        %v701 = vld [vmem:[%s2 + $0x10] sm:$0xf]
        %v702 = vld [vmem:[%s2 + $0x14] sm:$0xf]
        %v703 = vld [vmem:[%s2 + $0x18] sm:$0xf]
        %v704 = vld [vmem:[%s2 + $0x1c] sm:$0xf]
        %v705 = vpack.c.bf16 %v665, %v637
        %v706 = vpack.c.bf16 %v666, %v638
        %v707 = vpack.c.bf16 %v667, %v639
        %v708 = vpack.c.bf16 %v668, %v640
        %v717 = vunpack.c.l.b16 %v697
        %v718 = vunpack.c.l.b16 %v698
        %v719 = vunpack.c.l.b16 %v699
        %v720 = vunpack.c.l.b16 %v700
        %v721 = vunpack.c.l.b16 %v701
        %v722 = vunpack.c.l.b16 %v702
        %v723 = vunpack.c.l.b16 %v703
        %v724 = vunpack.c.l.b16 %v704
        %v725 = vpack.c.b16 %v718, %v717
        %v726 = vpack.c.b16 %v720, %v719
        %v727 = vpack.c.b16 %v722, %v721
        %v728 = vpack.c.b16 %v724, %v723
        %vm729 = vcmask 130048
        %v731 = vsel %vm729, %v725, 0
        %v734 = vsel %vm729, %v726, 0
        %v737 = vsel %vm729, %v727, 0
        %v740 = vsel %vm729, %v728, 0
        %742 = vmatprep.subr.bf16.mxu0 0
        %743 = vmatpush1.bf16.msra.mxu0 0
        %744 = vmatprep.subr.bf16.mxu0 0
        %745 = vmatpush1.bf16.msra.mxu0 0
        %746 = vmatprep.subr.bf16.mxu0 0
        %747 = vmatpush1.bf16.msra.mxu0 0
        %748 = vmatprep.subr.bf16.mxu0 0
        %749 = vmatpush1.bf16.msra.mxu0 0
        %750 = vmatprep.subr.bf16.mxu0 0
        %751 = vmatpush1.bf16.msra.mxu0 0
        %752 = vmatprep.subr.bf16.mxu0 0
        %753 = vmatpush1.bf16.msra.mxu0 0
        %754 = vmatprep.subr.bf16.mxu0 0
        %755 = vmatpush1.bf16.msra.mxu0 0
        %756 = vmatprep.subr.bf16.mxu0 %v706
        %757 = vmatpush1.bf16.msra.mxu0 %v705
        %758 = vmatprep.subr.bf16.mxu0 0
        %759 = vmatpush2.bf16.msra.mxu0 0
        %760 = vmatprep.subr.bf16.mxu0 0
        %761 = vmatpush2.bf16.msra.mxu0 0
        %762 = vmatprep.subr.bf16.mxu0 0
        %763 = vmatpush2.bf16.msra.mxu0 0
        %764 = vmatprep.subr.bf16.mxu0 0
        %765 = vmatpush2.bf16.msra.mxu0 0
        %766 = vmatprep.subr.bf16.mxu0 0
        %767 = vmatpush2.bf16.msra.mxu0 0
        %768 = vmatprep.subr.bf16.mxu0 0
        %769 = vmatpush2.bf16.msra.mxu0 0
        %770 = vmatprep.subr.bf16.mxu0 0
        %771 = vmatpush2.bf16.msra.mxu0 0
        %772 = vmatprep.subr.bf16.mxu0 0
        %773 = vmatpush2.bf16.msra.mxu0 0
        %774 = vmatprep.mubr.bf16.mxu0 0
        %775 = vmatmul.mubr.bf16.gmra.mxu0 %v731
        %v776 = vpop.f32.mrf.mxu0
        %v777 = vadd.f32 0.0, %v776
        %v778 = vpop.f32.mrf.mxu0
        %v779 = vadd.f32 0.0, %v778
        %v780 = vpop.f32.mrf.mxu0
        %v781 = vadd.f32 0.0, %v780
        %v782 = vpop.f32.mrf.mxu0
        %v783 = vadd.f32 0.0, %v782
        %784 = vmatprep.mubr.bf16.mxu0 0
        %785 = vmatmul.mubr.bf16.gmra.mxu0 %v734
        %v786 = vpop.f32.mrf.mxu0
        %v787 = vadd.f32 0.0, %v786
        %v788 = vpop.f32.mrf.mxu0
        %v789 = vadd.f32 0.0, %v788
        %v790 = vpop.f32.mrf.mxu0
        %v791 = vadd.f32 0.0, %v790
        %v792 = vpop.f32.mrf.mxu0
        %v793 = vadd.f32 0.0, %v792
        %794 = vmatprep.mubr.bf16.mxu0 0
        %795 = vmatmul.mubr.bf16.gmra.mxu0 %v737
        %v796 = vpop.f32.mrf.mxu0
        %v797 = vadd.f32 0.0, %v796
        %v798 = vpop.f32.mrf.mxu0
        %v799 = vadd.f32 0.0, %v798
        %v800 = vpop.f32.mrf.mxu0
        %v801 = vadd.f32 0.0, %v800
        %v802 = vpop.f32.mrf.mxu0
        %v803 = vadd.f32 0.0, %v802
        %804 = vmatprep.mubr.bf16.mxu0 0
        %805 = vmatmul.mubr.bf16.gmra.mxu0 %v740
        %v806 = vpop.f32.mrf.mxu0
        %v807 = vadd.f32 0.0, %v806
        %v808 = vpop.f32.mrf.mxu0
        %v809 = vadd.f32 0.0, %v808
        %v810 = vpop.f32.mrf.mxu0
        %v811 = vadd.f32 0.0, %v810
        %v812 = vpop.f32.mrf.mxu0
        %v813 = vadd.f32 0.0, %v812
        %814 = vdwg.mxu0
        %815 = vmatprep.subr.bf16.mxu0 0
        %816 = vmatpush1.bf16.msra.mxu0 0
        %817 = vmatprep.subr.bf16.mxu0 0
        %818 = vmatpush1.bf16.msra.mxu0 0
        %819 = vmatprep.subr.bf16.mxu0 0
        %820 = vmatpush1.bf16.msra.mxu0 0
        %821 = vmatprep.subr.bf16.mxu0 0
        %822 = vmatpush1.bf16.msra.mxu0 0
        %823 = vmatprep.subr.bf16.mxu0 0
        %824 = vmatpush1.bf16.msra.mxu0 0
        %825 = vmatprep.subr.bf16.mxu0 0
        %826 = vmatpush1.bf16.msra.mxu0 0
        %827 = vmatprep.subr.bf16.mxu0 0
        %828 = vmatpush1.bf16.msra.mxu0 0
        %829 = vmatprep.subr.bf16.mxu0 %v708
        %830 = vmatpush1.bf16.msra.mxu0 %v707
        %831 = vmatprep.subr.bf16.mxu0 0
        %832 = vmatpush2.bf16.msra.mxu0 0
        %833 = vmatprep.subr.bf16.mxu0 0
        %834 = vmatpush2.bf16.msra.mxu0 0
        %835 = vmatprep.subr.bf16.mxu0 0
        %836 = vmatpush2.bf16.msra.mxu0 0
        %837 = vmatprep.subr.bf16.mxu0 0
        %838 = vmatpush2.bf16.msra.mxu0 0
        %839 = vmatprep.subr.bf16.mxu0 0
        %840 = vmatpush2.bf16.msra.mxu0 0
        %841 = vmatprep.subr.bf16.mxu0 0
        %842 = vmatpush2.bf16.msra.mxu0 0
        %843 = vmatprep.subr.bf16.mxu0 0
        %844 = vmatpush2.bf16.msra.mxu0 0
        %845 = vmatprep.subr.bf16.mxu0 0
        %846 = vmatpush2.bf16.msra.mxu0 0
        %847 = vmatprep.mubr.bf16.mxu0 0
        %848 = vmatmul.mubr.bf16.gmra.mxu0 %v731
        %v849 = vpop.f32.mrf.mxu0
        %v850 = vadd.f32 0.0, %v849
        %v851 = vpop.f32.mrf.mxu0
        %v852 = vadd.f32 0.0, %v851
        %v853 = vpop.f32.mrf.mxu0
        %v854 = vadd.f32 0.0, %v853
        %v855 = vpop.f32.mrf.mxu0
        %v856 = vadd.f32 0.0, %v855
        %857 = vmatprep.mubr.bf16.mxu0 0
        %858 = vmatmul.mubr.bf16.gmra.mxu0 %v734
        %v859 = vpop.f32.mrf.mxu0
        %v860 = vadd.f32 0.0, %v859
        %v861 = vpop.f32.mrf.mxu0
        %v862 = vadd.f32 0.0, %v861
        %v863 = vpop.f32.mrf.mxu0
        %v864 = vadd.f32 0.0, %v863
        %v865 = vpop.f32.mrf.mxu0
        %v866 = vadd.f32 0.0, %v865
        %867 = vmatprep.mubr.bf16.mxu0 0
        %868 = vmatmul.mubr.bf16.gmra.mxu0 %v737
        %v869 = vpop.f32.mrf.mxu0
        %v870 = vadd.f32 0.0, %v869
        %v871 = vpop.f32.mrf.mxu0
        %v872 = vadd.f32 0.0, %v871
        %v873 = vpop.f32.mrf.mxu0
        %v874 = vadd.f32 0.0, %v873
        %v875 = vpop.f32.mrf.mxu0
        %v876 = vadd.f32 0.0, %v875
        %877 = vmatprep.mubr.bf16.mxu0 0
        %878 = vmatmul.mubr.bf16.gmra.mxu0 %v740
        %v879 = vpop.f32.mrf.mxu0
        %v880 = vadd.f32 0.0, %v879
        %v881 = vpop.f32.mrf.mxu0
        %v882 = vadd.f32 0.0, %v881
        %v883 = vpop.f32.mrf.mxu0
        %v884 = vadd.f32 0.0, %v883
        %v885 = vpop.f32.mrf.mxu0
        %v886 = vadd.f32 0.0, %v885
        %887 = vdwg.mxu0
        %v896 = vunpack.c.l.b16 %v669
        %v897 = vunpack.c.l.b16 %v670
        %v898 = vunpack.c.l.b16 %v671
        %v899 = vunpack.c.l.b16 %v672
        %v900 = vunpack.c.l.b16 %v673
        %v901 = vunpack.c.l.b16 %v674
        %v902 = vunpack.c.l.b16 %v675
        %v903 = vunpack.c.l.b16 %v676
        %v904 = vpack.c.b16 %v897, %v896
        %v905 = vpack.c.b16 %v899, %v898
        %v906 = vpack.c.b16 %v901, %v900
        %v907 = vpack.c.b16 %v903, %v902
        %vm908 = vcmask 179200
        %v910 = vsel %vm908, %v904, 0
        %v913 = vsel %vm908, %v905, 0
        %v916 = vsel %vm908, %v906, 0
        %v919 = vsel %vm908, %v907, 0
        %v922 = vsel %vm616, %v693, 0
        %v925 = vsel %vm616, %v694, 0
        %v928 = vsel %vm616, %v695, 0
        %v931 = vsel %vm616, %v696, 0
        %933 = vmatprep.subr.bf16.mxu0 0
        %934 = vmatpush1.bf16.msra.mxu0 0
        %935 = vmatprep.subr.bf16.mxu0 0
        %936 = vmatpush1.bf16.msra.mxu0 0
        %937 = vmatprep.subr.bf16.mxu0 0
        %938 = vmatpush1.bf16.msra.mxu0 0
        %939 = vmatprep.subr.bf16.mxu0 0
        %940 = vmatpush1.bf16.msra.mxu0 0
        %941 = vmatprep.subr.bf16.mxu0 0
        %942 = vmatpush1.bf16.msra.mxu0 0
        %943 = vmatprep.subr.bf16.mxu0 0
        %944 = vmatpush1.bf16.msra.mxu0 0
        %945 = vmatprep.subr.bf16.mxu0 %v925
        %946 = vmatpush1.bf16.msra.mxu0 %v922
        %947 = vmatprep.subr.bf16.mxu0 %v690
        %948 = vmatpush1.bf16.msra.mxu0 %v689
        %949 = vmatprep.subr.bf16.mxu0 0
        %950 = vmatpush2.bf16.msra.mxu0 0
        %951 = vmatprep.subr.bf16.mxu0 0
        %952 = vmatpush2.bf16.msra.mxu0 0
        %953 = vmatprep.subr.bf16.mxu0 0
        %954 = vmatpush2.bf16.msra.mxu0 0
        %955 = vmatprep.subr.bf16.mxu0 0
        %956 = vmatpush2.bf16.msra.mxu0 0
        %957 = vmatprep.subr.bf16.mxu0 0
        %958 = vmatpush2.bf16.msra.mxu0 0
        %959 = vmatprep.subr.bf16.mxu0 0
        %960 = vmatpush2.bf16.msra.mxu0 0
        %961 = vmatprep.subr.bf16.mxu0 0
        %962 = vmatpush2.bf16.msra.mxu0 0
        %963 = vmatprep.subr.bf16.mxu0 0
        %964 = vmatpush2.bf16.msra.mxu0 0
        %965 = vmatprep.mubr.bf16.mxu0 0
        %966 = vmatmul.mubr.bf16.gmra.mxu0 %v910
        %v967 = vpop.f32.mrf.mxu0
        %v968 = vadd.f32 %v777, %v967
        %v969 = vpop.f32.mrf.mxu0
        %v970 = vadd.f32 %v779, %v969
        %v971 = vpop.f32.mrf.mxu0
        %v972 = vadd.f32 %v781, %v971
        %v973 = vpop.f32.mrf.mxu0
        %v974 = vadd.f32 %v783, %v973
        %975 = vmatprep.mubr.bf16.mxu0 0
        %976 = vmatmul.mubr.bf16.gmra.mxu0 %v913
        %v977 = vpop.f32.mrf.mxu0
        %v978 = vadd.f32 %v787, %v977
        %v979 = vpop.f32.mrf.mxu0
        %v980 = vadd.f32 %v789, %v979
        %v981 = vpop.f32.mrf.mxu0
        %v982 = vadd.f32 %v791, %v981
        %v983 = vpop.f32.mrf.mxu0
        %v984 = vadd.f32 %v793, %v983
        %985 = vmatprep.mubr.bf16.mxu0 0
        %986 = vmatmul.mubr.bf16.gmra.mxu0 %v916
        %v987 = vpop.f32.mrf.mxu0
        %v988 = vadd.f32 %v797, %v987
        %v989 = vpop.f32.mrf.mxu0
        %v990 = vadd.f32 %v799, %v989
        %v991 = vpop.f32.mrf.mxu0
        %v992 = vadd.f32 %v801, %v991
        %v993 = vpop.f32.mrf.mxu0
        %v994 = vadd.f32 %v803, %v993
        %995 = vmatprep.mubr.bf16.mxu0 0
        %996 = vmatmul.mubr.bf16.gmra.mxu0 %v919
        %v997 = vpop.f32.mrf.mxu0
        %v998 = vadd.f32 %v807, %v997
        %v999 = vpop.f32.mrf.mxu0
        %v1000 = vadd.f32 %v809, %v999
        %v1001 = vpop.f32.mrf.mxu0
        %v1002 = vadd.f32 %v811, %v1001
        %v1003 = vpop.f32.mrf.mxu0
        %v1004 = vadd.f32 %v813, %v1003
        %1005 = vdwg.mxu0
        %1006 = vmatprep.subr.bf16.mxu0 0
        %1007 = vmatpush1.bf16.msra.mxu0 0
        %1008 = vmatprep.subr.bf16.mxu0 0
        %1009 = vmatpush1.bf16.msra.mxu0 0
        %1010 = vmatprep.subr.bf16.mxu0 0
        %1011 = vmatpush1.bf16.msra.mxu0 0
        %1012 = vmatprep.subr.bf16.mxu0 0
        %1013 = vmatpush1.bf16.msra.mxu0 0
        %1014 = vmatprep.subr.bf16.mxu0 0
        %1015 = vmatpush1.bf16.msra.mxu0 0
        %1016 = vmatprep.subr.bf16.mxu0 0
        %1017 = vmatpush1.bf16.msra.mxu0 0
        %1018 = vmatprep.subr.bf16.mxu0 %v931
        %1019 = vmatpush1.bf16.msra.mxu0 %v928
        %1020 = vmatprep.subr.bf16.mxu0 %v692
        %1021 = vmatpush1.bf16.msra.mxu0 %v691
        %1022 = vmatprep.subr.bf16.mxu0 0
        %1023 = vmatpush2.bf16.msra.mxu0 0
        %1024 = vmatprep.subr.bf16.mxu0 0
        %1025 = vmatpush2.bf16.msra.mxu0 0
        %1026 = vmatprep.subr.bf16.mxu0 0
        %1027 = vmatpush2.bf16.msra.mxu0 0
        %1028 = vmatprep.subr.bf16.mxu0 0
        %1029 = vmatpush2.bf16.msra.mxu0 0
        %1030 = vmatprep.subr.bf16.mxu0 0
        %1031 = vmatpush2.bf16.msra.mxu0 0
        %1032 = vmatprep.subr.bf16.mxu0 0
        %1033 = vmatpush2.bf16.msra.mxu0 0
        %1034 = vmatprep.subr.bf16.mxu0 0
        %1035 = vmatpush2.bf16.msra.mxu0 0
        %1036 = vmatprep.subr.bf16.mxu0 0
        %1037 = vmatpush2.bf16.msra.mxu0 0
        %1038 = vmatprep.mubr.bf16.mxu0 0
        %1039 = vmatmul.mubr.bf16.gmra.mxu0 %v910
        %v1040 = vpop.f32.mrf.mxu0
        %v1041 = vadd.f32 %v850, %v1040
        %v1042 = vpop.f32.mrf.mxu0
        %v1043 = vadd.f32 %v852, %v1042
        %v1044 = vpop.f32.mrf.mxu0
        %v1045 = vadd.f32 %v854, %v1044
        %v1046 = vpop.f32.mrf.mxu0
        %v1047 = vadd.f32 %v856, %v1046
        %1048 = vmatprep.mubr.bf16.mxu0 0
        %1049 = vmatmul.mubr.bf16.gmra.mxu0 %v913
        %v1050 = vpop.f32.mrf.mxu0
        %v1051 = vadd.f32 %v860, %v1050
        %v1052 = vpop.f32.mrf.mxu0
        %v1053 = vadd.f32 %v862, %v1052
        %v1054 = vpop.f32.mrf.mxu0
        %v1055 = vadd.f32 %v864, %v1054
        %v1056 = vpop.f32.mrf.mxu0
        %v1057 = vadd.f32 %v866, %v1056
        %1058 = vmatprep.mubr.bf16.mxu0 0
        %1059 = vmatmul.mubr.bf16.gmra.mxu0 %v916
        %v1060 = vpop.f32.mrf.mxu0
        %v1061 = vadd.f32 %v870, %v1060
        %v1062 = vpop.f32.mrf.mxu0
        %v1063 = vadd.f32 %v872, %v1062
        %v1064 = vpop.f32.mrf.mxu0
        %v1065 = vadd.f32 %v874, %v1064
        %v1066 = vpop.f32.mrf.mxu0
        %v1067 = vadd.f32 %v876, %v1066
        %1068 = vmatprep.mubr.bf16.mxu0 0
        %1069 = vmatmul.mubr.bf16.gmra.mxu0 %v919
        %v1070 = vpop.f32.mrf.mxu0
        %v1071 = vadd.f32 %v880, %v1070
        %v1072 = vpop.f32.mrf.mxu0
        %v1073 = vadd.f32 %v882, %v1072
        %v1074 = vpop.f32.mrf.mxu0
        %v1075 = vadd.f32 %v884, %v1074
        %v1076 = vpop.f32.mrf.mxu0
        %v1077 = vadd.f32 %v886, %v1076
        %1078 = vdwg.mxu0
        %v1079 = vmax.f32 %v968, 0.0
        %v1080 = vmax.f32 %v970, 0.0
        %v1081 = vmax.f32 %v1041, 0.0
        %v1082 = vmax.f32 %v1043, 0.0
        %v1083 = vmax.f32 %v972, 0.0
        %v1084 = vmax.f32 %v974, 0.0
        %v1085 = vmax.f32 %v1045, 0.0
        %v1086 = vmax.f32 %v1047, 0.0
        %v1087 = vmax.f32 %v978, 0.0
        %v1088 = vmax.f32 %v980, 0.0
        %v1089 = vmax.f32 %v1051, 0.0
        %v1090 = vmax.f32 %v1053, 0.0
        %v1091 = vmax.f32 %v982, 0.0
        %v1092 = vmax.f32 %v984, 0.0
        %v1093 = vmax.f32 %v1055, 0.0
        %v1094 = vmax.f32 %v1057, 0.0
        %v1095 = vmax.f32 %v988, 0.0
        %v1096 = vmax.f32 %v990, 0.0
        %v1097 = vmax.f32 %v1061, 0.0
        %v1098 = vmax.f32 %v1063, 0.0
        %v1099 = vmax.f32 %v992, 0.0
        %v1100 = vmax.f32 %v994, 0.0
        %v1101 = vmax.f32 %v1065, 0.0
        %v1102 = vmax.f32 %v1067, 0.0
        %v1103 = vmax.f32 %v998, 0.0
        %v1104 = vmax.f32 %v1000, 0.0
        %v1105 = vmax.f32 %v1071, 0.0
        %v1106 = vmax.f32 %v1073, 0.0
        %v1107 = vmax.f32 %v1002, 0.0
        %v1108 = vmax.f32 %v1004, 0.0
        %v1109 = vmax.f32 %v1075, 0.0
        %v1110 = vmax.f32 %v1077, 0.0
        %v1111 = vld [vmem:[%s3] sm:$0xf]
        %v1112 = vld [vmem:[%s3 + $0x4] sm:$0xf]
        %v1113 = vld [vmem:[%s3 + $0x8] sm:$0xf]
        %v1114 = vld [vmem:[%s3 + $0xc] sm:$0xf]
        %v1115 = vld [vmem:[%s3 + $0x10] sm:$0xf]
        %v1116 = vld [vmem:[%s3 + $0x14] sm:$0xf]
        %v1117 = vld [vmem:[%s3 + $0x18] sm:$0xf]
        %v1118 = vld [vmem:[%s3 + $0x1c] sm:$0xf]
        %v1119 = vpack.c.bf16 %v1083, %v1079
        %v1120 = vpack.c.bf16 %v1084, %v1080
        %v1121 = vpack.c.bf16 %v1085, %v1081
        %v1122 = vpack.c.bf16 %v1086, %v1082
        %v1123 = vpack.c.bf16 %v1091, %v1087
        %v1124 = vpack.c.bf16 %v1092, %v1088
        %v1125 = vpack.c.bf16 %v1093, %v1089
        %v1126 = vpack.c.bf16 %v1094, %v1090
        %v1127 = vpack.c.bf16 %v1099, %v1095
        %v1128 = vpack.c.bf16 %v1100, %v1096
        %v1129 = vpack.c.bf16 %v1101, %v1097
        %v1130 = vpack.c.bf16 %v1102, %v1098
        %v1131 = vpack.c.bf16 %v1107, %v1103
        %v1132 = vpack.c.bf16 %v1108, %v1104
        %v1133 = vpack.c.bf16 %v1109, %v1105
        %v1134 = vpack.c.bf16 %v1110, %v1106
        %v1143 = vunpack.c.l.b16 %v1111
        %v1144 = vunpack.c.l.b16 %v1112
        %v1145 = vunpack.c.l.b16 %v1113
        %v1146 = vunpack.c.l.b16 %v1114
        %v1147 = vunpack.c.l.b16 %v1115
        %v1148 = vunpack.c.l.b16 %v1116
        %v1149 = vunpack.c.l.b16 %v1117
        %v1150 = vunpack.c.l.b16 %v1118
        %v1151 = vpack.c.b16 %v1144, %v1143
        %v1152 = vpack.c.b16 %v1146, %v1145
        %v1153 = vpack.c.b16 %v1148, %v1147
        %v1154 = vpack.c.b16 %v1150, %v1149
        %vm1155 = vcmask 523264
        %v1157 = vsel %vm1155, %v1151, 0
        %v1160 = vsel %vm1155, %v1152, 0
        %v1163 = vsel %vm1155, %v1153, 0
        %v1166 = vsel %vm1155, %v1154, 0
        %1168 = vmatprep.subr.bf16.mxu0 0
        %1169 = vmatpush1.bf16.msra.mxu0 0
        %1170 = vmatprep.subr.bf16.mxu0 0
        %1171 = vmatpush1.bf16.msra.mxu0 0
        %1172 = vmatprep.subr.bf16.mxu0 0
        %1173 = vmatpush1.bf16.msra.mxu0 0
        %1174 = vmatprep.subr.bf16.mxu0 0
        %1175 = vmatpush1.bf16.msra.mxu0 0
        %1176 = vmatprep.subr.bf16.mxu0 %v1132
        %1177 = vmatpush1.bf16.msra.mxu0 %v1131
        %1178 = vmatprep.subr.bf16.mxu0 %v1128
        %1179 = vmatpush1.bf16.msra.mxu0 %v1127
        %1180 = vmatprep.subr.bf16.mxu0 %v1124
        %1181 = vmatpush1.bf16.msra.mxu0 %v1123
        %1182 = vmatprep.subr.bf16.mxu0 %v1120
        %1183 = vmatpush1.bf16.msra.mxu0 %v1119
        %1184 = vmatprep.subr.bf16.mxu0 0
        %1185 = vmatpush2.bf16.msra.mxu0 0
        %1186 = vmatprep.subr.bf16.mxu0 0
        %1187 = vmatpush2.bf16.msra.mxu0 0
        %1188 = vmatprep.subr.bf16.mxu0 0
        %1189 = vmatpush2.bf16.msra.mxu0 0
        %1190 = vmatprep.subr.bf16.mxu0 0
        %1191 = vmatpush2.bf16.msra.mxu0 0
        %1192 = vmatprep.subr.bf16.mxu0 0
        %1193 = vmatpush2.bf16.msra.mxu0 0
        %1194 = vmatprep.subr.bf16.mxu0 0
        %1195 = vmatpush2.bf16.msra.mxu0 0
        %1196 = vmatprep.subr.bf16.mxu0 0
        %1197 = vmatpush2.bf16.msra.mxu0 0
        %1198 = vmatprep.subr.bf16.mxu0 0
        %1199 = vmatpush2.bf16.msra.mxu0 0
        %1200 = vmatprep.mubr.bf16.mxu0 0
        %1201 = vmatmul.mubr.bf16.gmra.mxu0 %v1157
        %v1202 = vpop.f32.mrf.mxu0
        %v1203 = vadd.f32 0.0, %v1202
        %v1204 = vpop.f32.mrf.mxu0
        %v1205 = vadd.f32 0.0, %v1204
        %v1206 = vpop.f32.mrf.mxu0
        %v1207 = vadd.f32 0.0, %v1206
        %v1208 = vpop.f32.mrf.mxu0
        %v1209 = vadd.f32 0.0, %v1208
        %1210 = vmatprep.mubr.bf16.mxu0 0
        %1211 = vmatmul.mubr.bf16.gmra.mxu0 %v1160
        %v1212 = vpop.f32.mrf.mxu0
        %v1213 = vadd.f32 0.0, %v1212
        %v1214 = vpop.f32.mrf.mxu0
        %v1215 = vadd.f32 0.0, %v1214
        %v1216 = vpop.f32.mrf.mxu0
        %v1217 = vadd.f32 0.0, %v1216
        %v1218 = vpop.f32.mrf.mxu0
        %v1219 = vadd.f32 0.0, %v1218
        %1220 = vmatprep.mubr.bf16.mxu0 0
        %1221 = vmatmul.mubr.bf16.gmra.mxu0 %v1163
        %v1222 = vpop.f32.mrf.mxu0
        %v1223 = vadd.f32 0.0, %v1222
        %v1224 = vpop.f32.mrf.mxu0
        %v1225 = vadd.f32 0.0, %v1224
        %v1226 = vpop.f32.mrf.mxu0
        %v1227 = vadd.f32 0.0, %v1226
        %v1228 = vpop.f32.mrf.mxu0
        %v1229 = vadd.f32 0.0, %v1228
        %1230 = vmatprep.mubr.bf16.mxu0 0
        %1231 = vmatmul.mubr.bf16.gmra.mxu0 %v1166
        %v1232 = vpop.f32.mrf.mxu0
        %v1233 = vadd.f32 0.0, %v1232
        %v1234 = vpop.f32.mrf.mxu0
        %v1235 = vadd.f32 0.0, %v1234
        %v1236 = vpop.f32.mrf.mxu0
        %v1237 = vadd.f32 0.0, %v1236
        %v1238 = vpop.f32.mrf.mxu0
        %v1239 = vadd.f32 0.0, %v1238
        %1240 = vdwg.mxu0
        %1241 = vmatprep.subr.bf16.mxu0 0
        %1242 = vmatpush1.bf16.msra.mxu0 0
        %1243 = vmatprep.subr.bf16.mxu0 0
        %1244 = vmatpush1.bf16.msra.mxu0 0
        %1245 = vmatprep.subr.bf16.mxu0 0
        %1246 = vmatpush1.bf16.msra.mxu0 0
        %1247 = vmatprep.subr.bf16.mxu0 0
        %1248 = vmatpush1.bf16.msra.mxu0 0
        %1249 = vmatprep.subr.bf16.mxu0 %v1134
        %1250 = vmatpush1.bf16.msra.mxu0 %v1133
        %1251 = vmatprep.subr.bf16.mxu0 %v1130
        %1252 = vmatpush1.bf16.msra.mxu0 %v1129
        %1253 = vmatprep.subr.bf16.mxu0 %v1126
        %1254 = vmatpush1.bf16.msra.mxu0 %v1125
        %1255 = vmatprep.subr.bf16.mxu0 %v1122
        %1256 = vmatpush1.bf16.msra.mxu0 %v1121
        %1257 = vmatprep.subr.bf16.mxu0 0
        %1258 = vmatpush2.bf16.msra.mxu0 0
        %1259 = vmatprep.subr.bf16.mxu0 0
        %1260 = vmatpush2.bf16.msra.mxu0 0
        %1261 = vmatprep.subr.bf16.mxu0 0
        %1262 = vmatpush2.bf16.msra.mxu0 0
        %1263 = vmatprep.subr.bf16.mxu0 0
        %1264 = vmatpush2.bf16.msra.mxu0 0
        %1265 = vmatprep.subr.bf16.mxu0 0
        %1266 = vmatpush2.bf16.msra.mxu0 0
        %1267 = vmatprep.subr.bf16.mxu0 0
        %1268 = vmatpush2.bf16.msra.mxu0 0
        %1269 = vmatprep.subr.bf16.mxu0 0
        %1270 = vmatpush2.bf16.msra.mxu0 0
        %1271 = vmatprep.subr.bf16.mxu0 0
        %1272 = vmatpush2.bf16.msra.mxu0 0
        %1273 = vmatprep.mubr.bf16.mxu0 0
        %1274 = vmatmul.mubr.bf16.gmra.mxu0 %v1157
        %v1275 = vpop.f32.mrf.mxu0
        %v1276 = vadd.f32 0.0, %v1275
        %v1277 = vpop.f32.mrf.mxu0
        %v1278 = vadd.f32 0.0, %v1277
        %v1279 = vpop.f32.mrf.mxu0
        %v1280 = vadd.f32 0.0, %v1279
        %v1281 = vpop.f32.mrf.mxu0
        %v1282 = vadd.f32 0.0, %v1281
        %1283 = vmatprep.mubr.bf16.mxu0 0
        %1284 = vmatmul.mubr.bf16.gmra.mxu0 %v1160
        %v1285 = vpop.f32.mrf.mxu0
        %v1286 = vadd.f32 0.0, %v1285
        %v1287 = vpop.f32.mrf.mxu0
        %v1288 = vadd.f32 0.0, %v1287
        %v1289 = vpop.f32.mrf.mxu0
        %v1290 = vadd.f32 0.0, %v1289
        %v1291 = vpop.f32.mrf.mxu0
        %v1292 = vadd.f32 0.0, %v1291
        %1293 = vmatprep.mubr.bf16.mxu0 0
        %1294 = vmatmul.mubr.bf16.gmra.mxu0 %v1163
        %v1295 = vpop.f32.mrf.mxu0
        %v1296 = vadd.f32 0.0, %v1295
        %v1297 = vpop.f32.mrf.mxu0
        %v1298 = vadd.f32 0.0, %v1297
        %v1299 = vpop.f32.mrf.mxu0
        %v1300 = vadd.f32 0.0, %v1299
        %v1301 = vpop.f32.mrf.mxu0
        %v1302 = vadd.f32 0.0, %v1301
        %1303 = vmatprep.mubr.bf16.mxu0 0
        %1304 = vmatmul.mubr.bf16.gmra.mxu0 %v1166
        %v1305 = vpop.f32.mrf.mxu0
        %v1306 = vadd.f32 0.0, %v1305
        %v1307 = vpop.f32.mrf.mxu0
        %v1308 = vadd.f32 0.0, %v1307
        %v1309 = vpop.f32.mrf.mxu0
        %v1310 = vadd.f32 0.0, %v1309
        %v1311 = vpop.f32.mrf.mxu0
        %v1312 = vadd.f32 0.0, %v1311
        %1313 = vdwg.mxu0
        %v1314 = vmax.f32 %v1203, 0.0
        %v1315 = vmax.f32 %v1205, 0.0
        %v1316 = vmax.f32 %v1276, 0.0
        %v1317 = vmax.f32 %v1278, 0.0
        %v1318 = vmax.f32 %v1207, 0.0
        %v1319 = vmax.f32 %v1209, 0.0
        %v1320 = vmax.f32 %v1280, 0.0
        %v1321 = vmax.f32 %v1282, 0.0
        %v1322 = vmax.f32 %v1213, 0.0
        %v1323 = vmax.f32 %v1215, 0.0
        %v1324 = vmax.f32 %v1286, 0.0
        %v1325 = vmax.f32 %v1288, 0.0
        %v1326 = vmax.f32 %v1217, 0.0
        %v1327 = vmax.f32 %v1219, 0.0
        %v1328 = vmax.f32 %v1290, 0.0
        %v1329 = vmax.f32 %v1292, 0.0
        %v1330 = vmax.f32 %v1223, 0.0
        %v1331 = vmax.f32 %v1225, 0.0
        %v1332 = vmax.f32 %v1296, 0.0
        %v1333 = vmax.f32 %v1298, 0.0
        %v1334 = vmax.f32 %v1227, 0.0
        %v1335 = vmax.f32 %v1229, 0.0
        %v1336 = vmax.f32 %v1300, 0.0
        %v1337 = vmax.f32 %v1302, 0.0
        %v1338 = vmax.f32 %v1233, 0.0
        %v1339 = vmax.f32 %v1235, 0.0
        %v1340 = vmax.f32 %v1306, 0.0
        %v1341 = vmax.f32 %v1308, 0.0
        %v1342 = vmax.f32 %v1237, 0.0
        %v1343 = vmax.f32 %v1239, 0.0
        %v1344 = vmax.f32 %v1310, 0.0
        %v1345 = vmax.f32 %v1312, 0.0
        %v1346 = vld [vmem:[%s4] sm:$0xf]
        %v1347 = vpack.c.bf16 %v1318, %v1314
        %v1348 = vpack.c.bf16 %v1319, %v1315
        %v1349 = vpack.c.bf16 %v1320, %v1316
        %v1350 = vpack.c.bf16 %v1321, %v1317
        %v1351 = vpack.c.bf16 %v1326, %v1322
        %v1352 = vpack.c.bf16 %v1327, %v1323
        %v1353 = vpack.c.bf16 %v1328, %v1324
        %v1354 = vpack.c.bf16 %v1329, %v1325
        %v1355 = vpack.c.bf16 %v1334, %v1330
        %v1356 = vpack.c.bf16 %v1335, %v1331
        %v1357 = vpack.c.bf16 %v1336, %v1332
        %v1358 = vpack.c.bf16 %v1337, %v1333
        %v1359 = vpack.c.bf16 %v1342, %v1338
        %v1360 = vpack.c.bf16 %v1343, %v1339
        %v1361 = vpack.c.bf16 %v1344, %v1340
        %v1362 = vpack.c.bf16 %v1345, %v1341
        %v1364 = vsel %vm1155, %v1346, 0
        %1366 = vmatprep.subr.bf16.mxu0 0
        %1367 = vmatpush1.bf16.msra.mxu0 0
        %1368 = vmatprep.subr.bf16.mxu0 0
        %1369 = vmatpush1.bf16.msra.mxu0 0
        %1370 = vmatprep.subr.bf16.mxu0 0
        %1371 = vmatpush1.bf16.msra.mxu0 0
        %1372 = vmatprep.subr.bf16.mxu0 0
        %1373 = vmatpush1.bf16.msra.mxu0 0
        %1374 = vmatprep.subr.bf16.mxu0 %v1360
        %1375 = vmatpush1.bf16.msra.mxu0 %v1359
        %1376 = vmatprep.subr.bf16.mxu0 %v1356
        %1377 = vmatpush1.bf16.msra.mxu0 %v1355
        %1378 = vmatprep.subr.bf16.mxu0 %v1352
        %1379 = vmatpush1.bf16.msra.mxu0 %v1351
        %1380 = vmatprep.subr.bf16.mxu0 %v1348
        %1381 = vmatpush1.bf16.msra.mxu0 %v1347
        %1382 = vmatprep.subr.bf16.mxu0 0
        %1383 = vmatpush2.bf16.msra.mxu0 0
        %1384 = vmatprep.subr.bf16.mxu0 0
        %1385 = vmatpush2.bf16.msra.mxu0 0
        %1386 = vmatprep.subr.bf16.mxu0 0
        %1387 = vmatpush2.bf16.msra.mxu0 0
        %1388 = vmatprep.subr.bf16.mxu0 0
        %1389 = vmatpush2.bf16.msra.mxu0 0
        %1390 = vmatprep.subr.bf16.mxu0 0
        %1391 = vmatpush2.bf16.msra.mxu0 0
        %1392 = vmatprep.subr.bf16.mxu0 0
        %1393 = vmatpush2.bf16.msra.mxu0 0
        %1394 = vmatprep.subr.bf16.mxu0 0
        %1395 = vmatpush2.bf16.msra.mxu0 0
        %1396 = vmatprep.subr.bf16.mxu0 0
        %1397 = vmatpush2.bf16.msra.mxu0 0
        %1398 = vmatprep.mubr.bf16.mxu0 0
        %1399 = vmatmul.mubr.bf16.gmra.mxu0 %v1364
        %v1400 = vpop.f32.mrf.mxu0
        %v1401 = vadd.f32 0.0, %v1400
        %v1402 = vpop.f32.mrf.mxu0
        %v1403 = vadd.f32 0.0, %v1402
        %v1404 = vpop.f32.mrf.mxu0
        %v1405 = vpop.f32.mrf.mxu0
        %1406 = vdwg.mxu0
        %1407 = vmatprep.subr.bf16.mxu0 0
        %1408 = vmatpush1.bf16.msra.mxu0 0
        %1409 = vmatprep.subr.bf16.mxu0 0
        %1410 = vmatpush1.bf16.msra.mxu0 0
        %1411 = vmatprep.subr.bf16.mxu0 0
        %1412 = vmatpush1.bf16.msra.mxu0 0
        %1413 = vmatprep.subr.bf16.mxu0 0
        %1414 = vmatpush1.bf16.msra.mxu0 0
        %1415 = vmatprep.subr.bf16.mxu0 %v1362
        %1416 = vmatpush1.bf16.msra.mxu0 %v1361
        %1417 = vmatprep.subr.bf16.mxu0 %v1358
        %1418 = vmatpush1.bf16.msra.mxu0 %v1357
        %1419 = vmatprep.subr.bf16.mxu0 %v1354
        %1420 = vmatpush1.bf16.msra.mxu0 %v1353
        %1421 = vmatprep.subr.bf16.mxu0 %v1350
        %1422 = vmatpush1.bf16.msra.mxu0 %v1349
        %1423 = vmatprep.subr.bf16.mxu0 0
        %1424 = vmatpush2.bf16.msra.mxu0 0
        %1425 = vmatprep.subr.bf16.mxu0 0
        %1426 = vmatpush2.bf16.msra.mxu0 0
        %1427 = vmatprep.subr.bf16.mxu0 0
        %1428 = vmatpush2.bf16.msra.mxu0 0
        %1429 = vmatprep.subr.bf16.mxu0 0
        %1430 = vmatpush2.bf16.msra.mxu0 0
        %1431 = vmatprep.subr.bf16.mxu0 0
        %1432 = vmatpush2.bf16.msra.mxu0 0
        %1433 = vmatprep.subr.bf16.mxu0 0
        %1434 = vmatpush2.bf16.msra.mxu0 0
        %1435 = vmatprep.subr.bf16.mxu0 0
        %1436 = vmatpush2.bf16.msra.mxu0 0
        %1437 = vmatprep.subr.bf16.mxu0 0
        %1438 = vmatpush2.bf16.msra.mxu0 0
        %1439 = vmatprep.mubr.bf16.mxu0 0
        %1440 = vmatmul.mubr.bf16.gmra.mxu0 %v1364
        %v1441 = vpop.f32.mrf.mxu0
        %v1442 = vadd.f32 0.0, %v1441
        %v1443 = vpop.f32.mrf.mxu0
        %v1444 = vadd.f32 0.0, %v1443
        %v1445 = vpop.f32.mrf.mxu0
        %v1446 = vpop.f32.mrf.mxu0
        %1447 = vdwg.mxu0
        %v1448 = vxor.u32 %v1401, 2147483648
        %v1449 = vxor.u32 %v1403, 2147483648
        %v1450 = vxor.u32 %v1442, 2147483648
        %v1451 = vxor.u32 %v1444, 2147483648
        %v1452 = vmul.f32 %v1448, 1.442695
        %v1453 = vpow.pop %v1452
        %v1454 = vmul.f32 %v1449, 1.442695
        %v1455 = vpow.pop %v1454
        %v1456 = vmul.f32 %v1450, 1.442695
        %v1457 = vpow.pop %v1456
        %v1458 = vmul.f32 %v1451, 1.442695
        %v1459 = vpow.pop %v1458
        %v1460 = vadd.f32 %v1453, 1.0
        %v1461 = vadd.f32 %v1455, 1.0
        %v1462 = vadd.f32 %v1457, 1.0
        %v1463 = vadd.f32 %v1459, 1.0
        %v1464 = vrcp.pop %v1460
        %v1465 = vmul.f32 1.0, %v1464
        %v1466 = vrcp.pop %v1461
        %v1467 = vmul.f32 1.0, %v1466
        %v1468 = vrcp.pop %v1462
        %v1469 = vmul.f32 1.0, %v1468
        %v1470 = vrcp.pop %v1463
        %v1471 = vmul.f32 1.0, %v1470
        %v1476 = vcombine.low %v1465, %v1467
        %v1477 = vcombine.low %v1469, %v1471
        %1480 = vst [vmem:[%s242] sm:$0x77] %v1476
        %1481 = vst [vmem:[%s242 + $0x8] sm:$0x77] %v1477
        %s1482 = sand.u32 %s140, 1
        %s1483 = scalar_lea.sflag [#allocation4], %s1482
        %s1484 = sand.u32 %s140, 1
        %s1485 = smul.addr %s1484, 16
        %s1486 = scalar_lea.vmem [#allocation5], %s1485
        // Predicated region
        $region45: #{tpu_custom_call.1} parent=39 // pred_check
          %p1487 = pneg %p150
        $region46: #{tpu_custom_call.1} parent=39 // pred_check_branch
          %1489 = sbr.rel (%p1487) target = $region48
        $region47: #{tpu_custom_call.1} parent=39 // pred_region
          %s1490 = smul.u32 4, %s22
          %s1492 = ssub.s32 256, 256
          %1493 = vsyncadd %s1483, %s1492
          %s1494 = smul.addr %s1490, 64
          %s1495 = scalar_lea.hbm %s5, %s1494
          %s1497 = sshll.u32 %s1486, 4
          %s1498 = int_to_ptr.vmem [resolvable:$true] %s1497
          %1500 = dma.vmem_to_hbm [thread:$0]  %s1498, 256, %s1495, %s1483
        $region48: #{tpu_custom_call.1} parent=39 // pred_fallthru
          _
      $region40: #{tpu_custom_call.1} parent=5 // pred_fallthru
        _
      %p1501 = scmp.le.s32.totalorder 2, %s17
      // Predicated region
      $region49: #{tpu_custom_call.1} parent=5 // pred_check
        %p1502 = pneg %p1501
      $region50: #{tpu_custom_call.1} parent=5 // pred_check_branch
        %1504 = sbr.rel (%p1502) target = $region52
      $region51: #{tpu_custom_call.1} parent=5 // pred_region
        %s1505 = ssub.s32 %s17, 2
        // Predicated region
        $region53: #{tpu_custom_call.1} parent=51 // pred_check
          %p1506 = pneg %p156
        $region54: #{tpu_custom_call.1} parent=51 // pred_check_branch
          %1508 = sbr.rel (%p1506) target = $region56
        $region55: #{tpu_custom_call.1} parent=51 // pred_region
          %s1509 = sand.u32 %s141, 1
          %s1510 = scalar_lea.sflag [#allocation4], %s1509
          %s1511 = sand.u32 %s141, 1
          %s1512 = smul.addr %s1511, 16
          %s1513 = scalar_lea.vmem [#allocation5], %s1512
          %1514 = dma.done %s1510, 256
        $region56: #{tpu_custom_call.1} parent=51 // pred_fallthru
          _
      $region52: #{tpu_custom_call.1} parent=5 // pred_fallthru
        _
    $region6: #{tpu_custom_call.1} parent=1 // loop_footer
      %s21 = sadd.s32 1, %s17
    $region7: #{tpu_custom_call.1} parent=1 // loop_footer_branch
      %16 = sbr.rel target = $region3
    $region8: #{tpu_custom_call.1} parent=1 // loop_exit
      _
    %1515 = vsyncpa [#allocation3], 1
    %s1516 = scalar_lea.sflag [#allocation3], 1
    %1517 = vsyncpa %s1516, 1
    %1518 = vsyncpa [#allocation4], 1
    %s1519 = scalar_lea.sflag [#allocation4], 1
    %1520 = vsyncpa %s1519, 1

</llo_original>
